<compile_context>
chip_gen: v6e
topology: v6e:2x2x1
jax: 0.10.0
libtpu: 0.0.40
codegen_flags: <defaults>
</compile_context>

<pallas_src>
import functools

import jax
import jax.numpy as jnp
from jax import lax
from jax.experimental import pallas as pl
from jax.experimental.pallas import tpu as pltpu

LANE_PAD = 128  # pad lane-sparse feature dims (gcn_out=8, num_classes=1) to one lane


# ----------------------------- tiled encode_image matmul -----------------------------

def _matmul_bias_kernel(x_ref, w_ref, b_ref, o_ref, acc_ref):
    """One (tm, tn) output tile accumulated over the K grid axis."""
    k = pl.program_id(2)

    @pl.when(k == 0)
    def _init():
        acc_ref[...] = jnp.zeros_like(acc_ref)

    # activation cast happens in-kernel (no separate XLA convert pass over x)
    acc_ref[...] += jnp.dot(x_ref[...].astype(jnp.bfloat16), w_ref[...],
                            preferred_element_type=jnp.float32)

    @pl.when(k == pl.num_programs(2) - 1)
    def _finish():
        o_ref[...] = acc_ref[...] + b_ref[...]


def _pick_tile(dim, preferred, mult):
    """Largest tile <= preferred that is a multiple of `mult` and divides dim;
    falls back to the full dimension (legal block: equals array dim)."""
    if dim <= preferred:
        return dim
    t = (preferred // mult) * mult
    while t >= mult:
        if dim % t == 0:
            return t
        t -= mult
    return dim


def encode_image_matmul(x, w_bf16, bias, *, tm_pref=512, tn_pref=256, tk_pref=1024):
    """f_g1 = x @ w + bias, tiled and pipelined; bf16 MXU inputs, f32 accumulation.
    w_bf16 is stored bf16 once at param-prep time; x is cast per-tile in the kernel."""
    m, k = x.shape
    _, n = w_bf16.shape
    tm = _pick_tile(m, tm_pref, 16)   # 16: bf16 sublane packing friendly
    tn = _pick_tile(n, tn_pref, 128)
    tk = _pick_tile(k, tk_pref, 128)
    assert m % tm == 0 and n % tn == 0 and k % tk == 0
    grid = (m // tm, n // tn, k // tk)

    # TODO(synk): on v5e the output (and downstream f_g1 uses) could be bf16 to halve
    # the store traffic; kept f32 here so the GCN path consumes full-precision f_g1.
    return pl.pallas_call(
        _matmul_bias_kernel,
        out_shape=jax.ShapeDtypeStruct((m, n), jnp.float32),
        grid_spec=pltpu.PrefetchScalarGridSpec(
            num_scalar_prefetch=0,
            grid=grid,
            in_specs=[
                pl.BlockSpec((tm, tk), lambda i, j, kk: (i, kk)),
                pl.BlockSpec((tk, tn), lambda i, j, kk: (kk, j)),
                pl.BlockSpec((1, tn), lambda i, j, kk: (0, j)),
            ],
            out_specs=pl.BlockSpec((tm, tn), lambda i, j, kk: (i, j)),
            scratch_shapes=[pltpu.VMEM((tm, tn), jnp.float32)],
        ),
        compiler_params=pltpu.CompilerParams(
            dimension_semantics=("parallel", "parallel", "arbitrary"),
            # 48 MiB: generous for the ~6.5 MiB double-buffered footprint at the
            # largest tile prefs, and still leaves headroom on v7x (64 MiB physical).
            vmem_limit_bytes=48 * 1024 * 1024,
        ),
    )(x, w_bf16, bias.astype(jnp.float32))


# ----------------------------- fused sim + adjacency + GCN + fc -----------------------------

def _fused_sim_gcn_fc_kernel(x_ref, lab_c_ref, lab_r_ref,
                             w1_ref, b1_ref, w2_ref, b2_ref,
                             wfx_ref, wfg_ref, bfc_ref,
                             fg_ref, pred_ref, mask_ref):
    x = x_ref[...]                                   # [N, D] f32
    n, d_feat = x.shape
    xb = x.astype(jnp.bfloat16)

    # --- similarity f_g1 @ f_g1.T without materializing a transpose ---
    sim = lax.dot_general(xb, xb, (((1,), (1,)), ((), ())),
                          preferred_element_type=jnp.float32)        # [N, N]

    # --- threshold over cross-label pairs (generate_edge_index) ---
    same = lab_c_ref[...] == lab_r_ref[...]          # [N, N] bool (int32 labels)
    cross = jnp.logical_not(same)
    cnt = jnp.sum(cross.astype(jnp.float32))
    ssum = jnp.sum(jnp.where(cross, sim, 0.0))
    threshold = jnp.where(cnt > 0.0, ssum / jnp.maximum(cnt, 1.0), 0.0)

    row = lax.broadcasted_iota(jnp.int32, (n, n), 0)
    col = lax.broadcasted_iota(jnp.int32, (n, n), 1)
    diag = row == col
    edge = same & jnp.logical_not(diag) & (sim <= threshold)

    # --- symmetric gcn_norm D^-1/2 (A + I) D^-1/2, folded into feature operands:
    #     A_norm @ Y == d * (A_hat @ (d * Y)); avoids the axis-0 XLU reduce over the
    #     full NxN matrix and the two whole-matrix scaling passes. ---
    a_hat = edge.astype(jnp.float32) + diag.astype(jnp.float32)
    d_row = lax.rsqrt(jnp.sum(a_hat, axis=1, keepdims=True))          # [N, 1] f32
    a_b16 = a_hat.astype(jnp.bfloat16)                                # 0/1: exact

    # --- 2-layer GCN (relu in between); bf16 MXU matmuls, f32 accumulation ---
    p1 = jnp.dot(xb, w1_ref[...], preferred_element_type=jnp.float32)
    h = d_row * jnp.dot(a_b16, (d_row * p1).astype(jnp.bfloat16),
                        preferred_element_type=jnp.float32) + b1_ref[...]
    h = jnp.maximum(h, 0.0)

    p2 = jnp.dot(h.astype(jnp.bfloat16), w2_ref[...],
                 preferred_element_type=jnp.float32)                  # [N, 128] padded
    g = d_row * jnp.dot(a_b16, (d_row * p2).astype(jnp.bfloat16),
                        preferred_element_type=jnp.float32) + b2_ref[...]

    # --- fc over concat([f_g1, gcn]) via split, lane-padded weights ---
    pred_ref[...] = (jnp.dot(xb, wfx_ref[...], preferred_element_type=jnp.float32)
                     + jnp.dot(g.astype(jnp.bfloat16), wfg_ref[...],
                               preferred_element_type=jnp.float32)
                     + bfc_ref[...])                                  # [N, 128] lane-dense

    # --- concatenated feature written directly (no wrapper concat / HBM re-read) ---
    fg_ref[:, :d_feat] = x
    fg_ref[:, d_feat:] = g

    # --- loss_index as fixed-shape upper-triangular 0/1 mask of accepted (i, j) pairs ---
    mask_ref[...] = (edge & (col > row)).astype(jnp.float32)


def _full_spec(shape):
    nd = len(shape)
    return pl.BlockSpec(shape, lambda i, _nd=nd: (0,) * _nd)


def fused_sim_gcn_fc(f_g1, lab_col, lab_row, w1, b1, w2p, b2p, wfxp, wfgp, bfcp):
    n, d_feat = f_g1.shape
    pad = w2p.shape[1]
    inputs = [f_g1, lab_col, lab_row, w1, b1, w2p, b2p, wfxp, wfgp, bfcp]
    out_shapes = (
        jax.ShapeDtypeStruct((n, d_feat + pad), jnp.float32),  # f_g (lane-padded tail)
        jax.ShapeDtypeStruct((n, pad), jnp.float32),           # pred (lane-padded)
        jax.ShapeDtypeStruct((n, n), jnp.float32),             # loss mask (upper-tri, 0/1)
    )
    return pl.pallas_call(
        _fused_sim_gcn_fc_kernel,
        grid=(1,),
        in_specs=[_full_spec(a.shape) for a in inputs],
        out_specs=tuple(_full_spec(s.shape) for s in out_shapes),
        out_shape=out_shapes,
        compiler_params=pltpu.CompilerParams(
            dimension_semantics=("arbitrary",),
            vmem_limit_bytes=32 * 1024 * 1024,
        ),
    )(*inputs)


# ----------------------------- parameter preparation (one-time, outside jit) -----------------------------

def prepare_params(params):
    """Cast matmul weights to bf16 and lane-pad the small GCN/fc heads ONCE."""
    gcn_out = params["w2"].shape[1]
    ncls = params["wfc_x"].shape[1]
    prep = {
        "w_img": params["w_img"].astype(jnp.bfloat16),
        "b_img": params["b_img"].astype(jnp.float32),
        "w1": params["w1"].astype(jnp.bfloat16),
        "b1": params["b1"].astype(jnp.float32),
        "w2p": jnp.pad(params["w2"], ((0, 0), (0, LANE_PAD - gcn_out))).astype(jnp.bfloat16),
        "b2p": jnp.pad(params["b2"], ((0, 0), (0, LANE_PAD - gcn_out))).astype(jnp.float32),
        "wfxp": jnp.pad(params["wfc_x"], ((0, 0), (0, LANE_PAD - ncls))).astype(jnp.bfloat16),
        "wfgp": jnp.pad(params["wfc_g"],
                        ((0, LANE_PAD - gcn_out), (0, LANE_PAD - ncls))).astype(jnp.bfloat16),
        "bfcp": jnp.pad(params["bfc"], ((0, 0), (0, LANE_PAD - ncls))).astype(jnp.float32),
    }
    prep = jax.tree_util.tree_map(jnp.asarray, prep)
    return prep, gcn_out, ncls


# ----------------------------- full forward -----------------------------

@functools.partial(jax.jit, static_argnames=("gcn_out_dim", "num_classes"))
def clip_gcn_forward(image, labels, prep, *, gcn_out_dim, num_classes):
    n = image.shape[0]
    x_flat = image.reshape(n, -1)                     # NCHW -> [N, C*H*W]

    # encode_image stand-in (tiled Pallas matmul + bias)
    f_g1 = encode_image_matmul(x_flat, prep["w_img"], prep["b_img"])

    # labels stay int32 (exact equality), shaped [N,1] / [1,N] for the in-kernel mask
    lab = labels.astype(jnp.int32)
    lab_col = lab.reshape(n, 1)
    lab_row = lab.reshape(1, n)

    fg_pad, pred_pad, mask_f = fused_sim_gcn_fc(
        f_g1, lab_col, lab_row, prep["w1"], prep["b1"],
        prep["w2p"], prep["b2p"], prep["wfxp"], prep["wfgp"], prep["bfcp"])

    d_feat = f_g1.shape[1]
    f_g = fg_pad[:, :d_feat + gcn_out_dim]            # slice off lane padding only
    pred = pred_pad[:, :num_classes]
    return pred, f_g, mask_f, f_g1                    # mask returned as 0/1 float


# Plain-JAX reference of the same math (textbook gcn_norm, matching bf16 matmul casts).
def reference_forward(image, labels, params):
    n = image.shape[0]
    x_flat = image.reshape(n, -1)
    f_g1 = jnp.dot(x_flat.astype(jnp.bfloat16), params["w_img"].astype(jnp.bfloat16),
                   preferred_element_type=jnp.float32) + params["b_img"]
    xb = f_g1.astype(jnp.bfloat16)
    sim = lax.dot_general(xb, xb, (((1,), (1,)), ((), ())),
                          preferred_element_type=jnp.float32)
    same = labels[:, None] == labels[None, :]
    cross = jnp.logical_not(same)
    cnt = jnp.sum(cross.astype(jnp.float32))
    ssum = jnp.sum(jnp.where(cross, sim, 0.0))
    threshold = jnp.where(cnt > 0.0, ssum / jnp.maximum(cnt, 1.0), 0.0)
    eye = jnp.eye(n, dtype=bool)
    edge = same & jnp.logical_not(eye) & (sim <= threshold)
    a_hat = edge.astype(jnp.float32) + jnp.eye(n, dtype=jnp.float32)
    d = lax.rsqrt(jnp.sum(a_hat, axis=1, keepdims=True))
    a_norm = a_hat * d * d.T

    def bdot(a, b):
        return jnp.dot(a.astype(jnp.bfloat16), b.astype(jnp.bfloat16),
                       preferred_element_type=jnp.float32)

    h = jnp.maximum(bdot(a_norm, bdot(f_g1, params["w1"])) + params["b1"], 0.0)
    g = bdot(a_norm, bdot(h, params["w2"])) + params["b2"]
    pred = bdot(f_g1, params["wfc_x"]) + bdot(g, params["wfc_g"]) + params["bfc"]
    f_g = jnp.concatenate([f_g1, g], axis=-1)
    loss_mask = edge & jnp.triu(jnp.ones((n, n), dtype=bool), k=1)
    return pred, f_g, loss_mask, f_g1, sim, threshold


# ----------------------------- main -----------------------------

if __name__ == "__main__":
    # Small shapes consistent with the module structure:
    # encoder dim D_FEAT (orig 768), GCN hidden (orig 512), GCN out (orig 50), fc -> 1.
    N, C, H, W = 8, 3, 16, 16
    D_FEAT, HIDDEN, GCN_OUT, NUM_CLASSES = 128, 128, 8, 1

    key = jax.random.PRNGKey(0)
    ks = jax.random.split(key, 12)

    image = jax.random.normal(ks[0], (N, C, H, W), jnp.float32)
    labels = jnp.array([0, 1, 0, 1, 0, 1, 0, 1], jnp.int32)

    params = {
        "w_img": 0.02 * jax.random.normal(ks[1], (C * H * W, D_FEAT), jnp.float32),
        "b_img": 0.01 * jax.random.normal(ks[2], (1, D_FEAT), jnp.float32),
        "w1":    0.1 * jax.random.normal(ks[3], (D_FEAT, HIDDEN), jnp.float32),
        "b1":    0.01 * jax.random.normal(ks[4], (1, HIDDEN), jnp.float32),
        "w2":    0.1 * jax.random.normal(ks[5], (HIDDEN, GCN_OUT), jnp.float32),
        "b2":    0.01 * jax.random.normal(ks[6], (1, GCN_OUT), jnp.float32),
        "wfc_x": 0.1 * jax.random.normal(ks[7], (D_FEAT, NUM_CLASSES), jnp.float32),
        "wfc_g": 0.1 * jax.random.normal(ks[8], (GCN_OUT, NUM_CLASSES), jnp.float32),
        "bfc":   0.01 * jax.random.normal(ks[9], (1, NUM_CLASSES), jnp.float32),
    }

    # one-time parameter preparation (bf16 weights, lane-padded heads) -- outside jit
    prep, gcn_out_dim, ncls = prepare_params(params)

    pred, f_g, mask_f, f_g1 = clip_gcn_forward(
        image, labels, prep, gcn_out_dim=gcn_out_dim, num_classes=ncls)
    jax.block_until_ready((pred, f_g, mask_f, f_g1))

    # sanity check against plain-JAX reference (matching bf16 matmul precision)
    r_pred, r_fg, r_mask, r_f1, r_sim, r_thr = reference_forward(image, labels, params)
    assert jnp.allclose(f_g1, r_f1, rtol=2e-2, atol=2e-2)
    assert jnp.allclose(pred, r_pred, rtol=2e-2, atol=2e-2)
    assert jnp.allclose(f_g, r_fg, rtol=2e-2, atol=2e-2)

    # loss-mask check: exact agreement, except entries whose similarity sits numerically
    # on the threshold (MXU vs XLA accumulation order can flip those borderline edges).
    mask_k = mask_f > 0.5
    mismatch = mask_k != r_mask
    if bool(jnp.any(mismatch)):
        near_thr = jnp.abs(r_sim - r_thr) <= 1e-3 * (jnp.abs(r_thr) + 1.0)
        assert bool(jnp.all(jnp.where(mismatch, near_thr, True))), "loss mask mismatch"

    assert pred.shape == (N, NUM_CLASSES)
    assert f_g.shape == (N, D_FEAT + GCN_OUT)
    assert mask_f.shape == (N, N)

    print("KERNEL_OK")
</pallas_src>

<mosaic_0001>
module attributes {stable_mosaic.version = 11 : i64} {
  func.func @_fused_sim_gcn_fc_kernel(%arg0: i32, %arg1: memref<8x128xf32, #tpu.memory_space<vmem>>, %arg2: memref<8x1xi32, #tpu.memory_space<vmem>>, %arg3: memref<1x8xi32, #tpu.memory_space<vmem>>, %arg4: memref<128x128xbf16, #tpu.memory_space<vmem>>, %arg5: memref<1x128xf32, #tpu.memory_space<vmem>>, %arg6: memref<128x128xbf16, #tpu.memory_space<vmem>>, %arg7: memref<1x128xf32, #tpu.memory_space<vmem>>, %arg8: memref<128x128xbf16, #tpu.memory_space<vmem>>, %arg9: memref<128x128xbf16, #tpu.memory_space<vmem>>, %arg10: memref<1x128xf32, #tpu.memory_space<vmem>>, %arg11: memref<8x256xf32, #tpu.memory_space<vmem>>, %arg12: memref<8x128xf32, #tpu.memory_space<vmem>>, %arg13: memref<8x8xf32, #tpu.memory_space<vmem>>) attributes {dimension_semantics = [#tpu.dimension_semantics<arbitrary>], iteration_bounds = array<i64: 1>, scalar_prefetch = 0 : i64, scratch_operands = 0 : i64, tpu.core_type = #tpu.core_type<tc>, window_params = [{pipeline_mode = #tpu.pipeline_mode<synchronous>, transform_indices = @transform_0, window_bounds = array<i64: 8, 128>}, {pipeline_mode = #tpu.pipeline_mode<synchronous>, transform_indices = @transform_1, window_bounds = array<i64: 8, 1>}, {pipeline_mode = #tpu.pipeline_mode<synchronous>, transform_indices = @transform_2, window_bounds = array<i64: 1, 8>}, {pipeline_mode = #tpu.pipeline_mode<synchronous>, transform_indices = @transform_3, window_bounds = array<i64: 128, 128>}, {pipeline_mode = #tpu.pipeline_mode<synchronous>, transform_indices = @transform_4, window_bounds = array<i64: 1, 128>}, {pipeline_mode = #tpu.pipeline_mode<synchronous>, transform_indices = @transform_5, window_bounds = array<i64: 128, 128>}, {pipeline_mode = #tpu.pipeline_mode<synchronous>, transform_indices = @transform_6, window_bounds = array<i64: 1, 128>}, {pipeline_mode = #tpu.pipeline_mode<synchronous>, transform_indices = @transform_7, window_bounds = array<i64: 128, 128>}, {pipeline_mode = #tpu.pipeline_mode<synchronous>, transform_indices = @transform_8, window_bounds = array<i64: 128, 128>}, {pipeline_mode = #tpu.pipeline_mode<synchronous>, transform_indices = @transform_9, window_bounds = array<i64: 1, 128>}, {pipeline_mode = #tpu.pipeline_mode<synchronous>, transform_indices = @transform_10, window_bounds = array<i64: 8, 256>}, {pipeline_mode = #tpu.pipeline_mode<synchronous>, transform_indices = @transform_11, window_bounds = array<i64: 8, 128>}, {pipeline_mode = #tpu.pipeline_mode<synchronous>, transform_indices = @transform_12, window_bounds = array<i64: 8, 8>}]} {
    %c0 = arith.constant 0 : index
    %c0_0 = arith.constant 0 : index
    %0 = vector.load %arg1[%c0, %c0_0] : memref<8x128xf32, #tpu.memory_space<vmem>>, vector<8x128xf32>
    %1 = arith.truncf %0 : vector<8x128xf32> to vector<8x128xbf16>
    %cst = arith.constant dense<0.000000e+00> : vector<8x8xf32>
    %2 = tpu.matmul %1, %1, %cst {dimension_numbers = #tpu.dot_dimension_numbers<[1], [1], [0], [0], [0, 0, 1, 0], [], []>} : vector<8x128xbf16>, vector<8x128xbf16>, vector<8x8xf32> -> vector<8x8xf32>
    %c0_1 = arith.constant 0 : index
    %c0_2 = arith.constant 0 : index
    %3 = vector.load %arg2[%c0_1, %c0_2] : memref<8x1xi32, #tpu.memory_space<vmem>>, vector<8x1xi32>
    %c0_3 = arith.constant 0 : index
    %c0_4 = arith.constant 0 : index
    %4 = vector.load %arg3[%c0_3, %c0_4] : memref<1x8xi32, #tpu.memory_space<vmem>>, vector<1x8xi32>
    %5 = vector.broadcast %3 : vector<8x1xi32> to vector<8x8xi32>
    %6 = vector.broadcast %4 : vector<1x8xi32> to vector<8x8xi32>
    %7 = arith.cmpi eq, %5, %6 : vector<8x8xi32>
    %cst_5 = arith.constant dense<true> : vector<8x8xi1>
    %8 = arith.xori %7, %cst_5 : vector<8x8xi1>
    %9 = arith.extui %8 : vector<8x8xi1> to vector<8x8xi32>
    %10 = arith.sitofp %9 : vector<8x8xi32> to vector<8x8xf32>
    %11 = vector.shape_cast %10 : vector<8x8xf32> to vector<1x8x8xf32>
    %cst_6 = arith.constant dense<0.000000e+00> : vector<1xf32>
    %12 = vector.multi_reduction <add>, %11, %cst_6 [1, 2] : vector<1x8x8xf32> to vector<1xf32>
    %13 = vector.shape_cast %12 : vector<1xf32> to vector<1x1x1xf32>
    %14 = vector.extract %13[0, 0, 0] : f32 from vector<1x1x1xf32>
    %cst_7 = arith.constant 0.000000e+00 : f32
    %15 = vector.broadcast %cst_7 : f32 to vector<8x8xf32>
    %16 = arith.select %8, %2, %15 : vector<8x8xi1>, vector<8x8xf32>
    %17 = vector.shape_cast %16 : vector<8x8xf32> to vector<1x8x8xf32>
    %cst_8 = arith.constant dense<0.000000e+00> : vector<1xf32>
    %18 = vector.multi_reduction <add>, %17, %cst_8 [1, 2] : vector<1x8x8xf32> to vector<1xf32>
    %19 = vector.shape_cast %18 : vector<1xf32> to vector<1x1x1xf32>
    %20 = vector.extract %19[0, 0, 0] : f32 from vector<1x1x1xf32>
    %cst_9 = arith.constant 0.000000e+00 : f32
    %21 = arith.cmpf ogt, %14, %cst_9 : f32
    %cst_10 = arith.constant 1.000000e+00 : f32
    %22 = arith.maximumf %14, %cst_10 : f32
    %23 = arith.divf %20, %22 : f32
    %cst_11 = arith.constant 0.000000e+00 : f32
    %24 = arith.select %21, %23, %cst_11 : f32
    %25 = tpu.iota {dimensions = array<i32: 0>} : vector<8x8xi32>
    %26 = tpu.iota {dimensions = array<i32: 1>} : vector<8x8xi32>
    %27 = arith.cmpi eq, %25, %26 : vector<8x8xi32>
    %cst_12 = arith.constant dense<true> : vector<8x8xi1>
    %28 = arith.xori %27, %cst_12 : vector<8x8xi1>
    %29 = arith.andi %7, %28 : vector<8x8xi1>
    %30 = vector.broadcast %24 : f32 to vector<8x8xf32>
    %31 = arith.cmpf ole, %2, %30 : vector<8x8xf32>
    %32 = arith.andi %29, %31 : vector<8x8xi1>
    %33 = arith.extui %32 : vector<8x8xi1> to vector<8x8xi32>
    %34 = arith.sitofp %33 : vector<8x8xi32> to vector<8x8xf32>
    %35 = arith.extui %27 : vector<8x8xi1> to vector<8x8xi32>
    %36 = arith.sitofp %35 : vector<8x8xi32> to vector<8x8xf32>
    %37 = arith.addf %34, %36 : vector<8x8xf32>
    %cst_13 = arith.constant dense<0.000000e+00> : vector<8xf32>
    %38 = vector.multi_reduction <add>, %37, %cst_13 [1] : vector<8x8xf32> to vector<8xf32>
    %39 = vector.shape_cast %38 : vector<8xf32> to vector<8x1xf32>
    %40 = math.rsqrt %39 : vector<8x1xf32>
    %41 = arith.truncf %37 : vector<8x8xf32> to vector<8x8xbf16>
    %c0_14 = arith.constant 0 : index
    %c0_15 = arith.constant 0 : index
    %42 = vector.load %arg4[%c0_14, %c0_15] : memref<128x128xbf16, #tpu.memory_space<vmem>>, vector<128x128xbf16>
    %cst_16 = arith.constant dense<0.000000e+00> : vector<8x128xf32>
    %43 = tpu.matmul %1, %42, %cst_16 {dimension_numbers = #tpu.dot_dimension_numbers<[1], [0], [0], [1], [0, 0, 1, 1], [], []>} : vector<8x128xbf16>, vector<128x128xbf16>, vector<8x128xf32> -> vector<8x128xf32>
    %44 = vector.broadcast %40 : vector<8x1xf32> to vector<8x128xf32>
    %45 = arith.mulf %44, %43 : vector<8x128xf32>
    %46 = arith.truncf %45 : vector<8x128xf32> to vector<8x128xbf16>
    %cst_17 = arith.constant dense<0.000000e+00> : vector<8x128xf32>
    %47 = tpu.matmul %41, %46, %cst_17 {dimension_numbers = #tpu.dot_dimension_numbers<[1], [0], [0], [1], [0, 0, 1, 1], [], []>} : vector<8x8xbf16>, vector<8x128xbf16>, vector<8x128xf32> -> vector<8x128xf32>
    %48 = vector.broadcast %40 : vector<8x1xf32> to vector<8x128xf32>
    %49 = arith.mulf %48, %47 : vector<8x128xf32>
    %c0_18 = arith.constant 0 : index
    %c0_19 = arith.constant 0 : index
    %50 = vector.load %arg5[%c0_18, %c0_19] : memref<1x128xf32, #tpu.memory_space<vmem>>, vector<1x128xf32>
    %51 = vector.broadcast %50 : vector<1x128xf32> to vector<8x128xf32>
    %52 = arith.addf %49, %51 : vector<8x128xf32>
    %cst_20 = arith.constant 0.000000e+00 : f32
    %53 = vector.broadcast %cst_20 : f32 to vector<8x128xf32>
    %54 = arith.maximumf %52, %53 : vector<8x128xf32>
    %55 = arith.truncf %54 : vector<8x128xf32> to vector<8x128xbf16>
    %c0_21 = arith.constant 0 : index
    %c0_22 = arith.constant 0 : index
    %56 = vector.load %arg6[%c0_21, %c0_22] : memref<128x128xbf16, #tpu.memory_space<vmem>>, vector<128x128xbf16>
    %cst_23 = arith.constant dense<0.000000e+00> : vector<8x128xf32>
    %57 = tpu.matmul %55, %56, %cst_23 {dimension_numbers = #tpu.dot_dimension_numbers<[1], [0], [0], [1], [0, 0, 1, 1], [], []>} : vector<8x128xbf16>, vector<128x128xbf16>, vector<8x128xf32> -> vector<8x128xf32>
    %58 = vector.broadcast %40 : vector<8x1xf32> to vector<8x128xf32>
    %59 = arith.mulf %58, %57 : vector<8x128xf32>
    %60 = arith.truncf %59 : vector<8x128xf32> to vector<8x128xbf16>
    %cst_24 = arith.constant dense<0.000000e+00> : vector<8x128xf32>
    %61 = tpu.matmul %41, %60, %cst_24 {dimension_numbers = #tpu.dot_dimension_numbers<[1], [0], [0], [1], [0, 0, 1, 1], [], []>} : vector<8x8xbf16>, vector<8x128xbf16>, vector<8x128xf32> -> vector<8x128xf32>
    %62 = vector.broadcast %40 : vector<8x1xf32> to vector<8x128xf32>
    %63 = arith.mulf %62, %61 : vector<8x128xf32>
    %c0_25 = arith.constant 0 : index
    %c0_26 = arith.constant 0 : index
    %64 = vector.load %arg7[%c0_25, %c0_26] : memref<1x128xf32, #tpu.memory_space<vmem>>, vector<1x128xf32>
    %65 = vector.broadcast %64 : vector<1x128xf32> to vector<8x128xf32>
    %66 = arith.addf %63, %65 : vector<8x128xf32>
    %c0_27 = arith.constant 0 : index
    %c0_28 = arith.constant 0 : index
    %67 = vector.load %arg8[%c0_27, %c0_28] : memref<128x128xbf16, #tpu.memory_space<vmem>>, vector<128x128xbf16>
    %cst_29 = arith.constant dense<0.000000e+00> : vector<8x128xf32>
    %68 = tpu.matmul %1, %67, %cst_29 {dimension_numbers = #tpu.dot_dimension_numbers<[1], [0], [0], [1], [0, 0, 1, 1], [], []>} : vector<8x128xbf16>, vector<128x128xbf16>, vector<8x128xf32> -> vector<8x128xf32>
    %69 = arith.truncf %66 : vector<8x128xf32> to vector<8x128xbf16>
    %c0_30 = arith.constant 0 : index
    %c0_31 = arith.constant 0 : index
    %70 = vector.load %arg9[%c0_30, %c0_31] : memref<128x128xbf16, #tpu.memory_space<vmem>>, vector<128x128xbf16>
    %cst_32 = arith.constant dense<0.000000e+00> : vector<8x128xf32>
    %71 = tpu.matmul %69, %70, %cst_32 {dimension_numbers = #tpu.dot_dimension_numbers<[1], [0], [0], [1], [0, 0, 1, 1], [], []>} : vector<8x128xbf16>, vector<128x128xbf16>, vector<8x128xf32> -> vector<8x128xf32>
    %72 = arith.addf %68, %71 : vector<8x128xf32>
    %c0_33 = arith.constant 0 : index
    %c0_34 = arith.constant 0 : index
    %73 = vector.load %arg10[%c0_33, %c0_34] : memref<1x128xf32, #tpu.memory_space<vmem>>, vector<1x128xf32>
    %74 = vector.broadcast %73 : vector<1x128xf32> to vector<8x128xf32>
    %75 = arith.addf %72, %74 : vector<8x128xf32>
    %c0_35 = arith.constant 0 : index
    %c0_36 = arith.constant 0 : index
    %76 = vector.load %arg12[%c0_35, %c0_36] : memref<8x128xf32, #tpu.memory_space<vmem>>, vector<8x128xf32>
    tpu.vector_store %arg12[%c0_35, %c0_36], %75 {strides = array<i32>} : memref<8x128xf32, #tpu.memory_space<vmem>>, vector<8x128xf32>,
    %c0_37 = arith.constant 0 : index
    %c0_38 = arith.constant 0 : index
    %77 = vector.load %arg11[%c0_37, %c0_38] : memref<8x256xf32, #tpu.memory_space<vmem>>, vector<8x128xf32>
    tpu.vector_store %arg11[%c0_37, %c0_38], %0 {strides = array<i32>} : memref<8x256xf32, #tpu.memory_space<vmem>>, vector<8x128xf32>,
    %c0_39 = arith.constant 0 : index
    %c128 = arith.constant 128 : index
    %78 = vector.load %arg11[%c0_39, %c128] : memref<8x256xf32, #tpu.memory_space<vmem>>, vector<8x128xf32>
    tpu.vector_store %arg11[%c0_39, %c128], %66 {strides = array<i32>} : memref<8x256xf32, #tpu.memory_space<vmem>>, vector<8x128xf32>,
    %79 = arith.cmpi sgt, %26, %25 : vector<8x8xi32>
    %80 = arith.andi %32, %79 : vector<8x8xi1>
    %81 = arith.extui %80 : vector<8x8xi1> to vector<8x8xi32>
    %82 = arith.sitofp %81 : vector<8x8xi32> to vector<8x8xf32>
    %c0_40 = arith.constant 0 : index
    %c0_41 = arith.constant 0 : index
    %83 = vector.load %arg13[%c0_40, %c0_41] : memref<8x8xf32, #tpu.memory_space<vmem>>, vector<8x8xf32>
    tpu.vector_store %arg13[%c0_40, %c0_41], %82 {strides = array<i32>} : memref<8x8xf32, #tpu.memory_space<vmem>>, vector<8x8xf32>,
    return
  }
  func.func @transform_0(%arg0: i32) -> (i32, i32) {
    %c0_i32 = arith.constant 0 : i32
    %c0_i32_0 = arith.constant 0 : i32
    %c0_i32_1 = arith.constant 0 : i32
    return %c0_i32, %c0_i32_0 : i32, i32
  }
  func.func @transform_1(%arg0: i32) -> (i32, i32) {
    %c0_i32 = arith.constant 0 : i32
    %c0_i32_0 = arith.constant 0 : i32
    %c0_i32_1 = arith.constant 0 : i32
    return %c0_i32, %c0_i32_0 : i32, i32
  }
  func.func @transform_2(%arg0: i32) -> (i32, i32) {
    %c0_i32 = arith.constant 0 : i32
    %c0_i32_0 = arith.constant 0 : i32
    %c0_i32_1 = arith.constant 0 : i32
    return %c0_i32, %c0_i32_0 : i32, i32
  }
  func.func @transform_3(%arg0: i32) -> (i32, i32) {
    %c0_i32 = arith.constant 0 : i32
    %c0_i32_0 = arith.constant 0 : i32
    %c0_i32_1 = arith.constant 0 : i32
    return %c0_i32, %c0_i32_0 : i32, i32
  }
  func.func @transform_4(%arg0: i32) -> (i32, i32) {
    %c0_i32 = arith.constant 0 : i32
    %c0_i32_0 = arith.constant 0 : i32
    %c0_i32_1 = arith.constant 0 : i32
    return %c0_i32, %c0_i32_0 : i32, i32
  }
  func.func @transform_5(%arg0: i32) -> (i32, i32) {
    %c0_i32 = arith.constant 0 : i32
    %c0_i32_0 = arith.constant 0 : i32
    %c0_i32_1 = arith.constant 0 : i32
    return %c0_i32, %c0_i32_0 : i32, i32
  }
  func.func @transform_6(%arg0: i32) -> (i32, i32) {
    %c0_i32 = arith.constant 0 : i32
    %c0_i32_0 = arith.constant 0 : i32
    %c0_i32_1 = arith.constant 0 : i32
    return %c0_i32, %c0_i32_0 : i32, i32
  }
  func.func @transform_7(%arg0: i32) -> (i32, i32) {
    %c0_i32 = arith.constant 0 : i32
    %c0_i32_0 = arith.constant 0 : i32
    %c0_i32_1 = arith.constant 0 : i32
    return %c0_i32, %c0_i32_0 : i32, i32
  }
  func.func @transform_8(%arg0: i32) -> (i32, i32) {
    %c0_i32 = arith.constant 0 : i32
    %c0_i32_0 = arith.constant 0 : i32
    %c0_i32_1 = arith.constant 0 : i32
    return %c0_i32, %c0_i32_0 : i32, i32
  }
  func.func @transform_9(%arg0: i32) -> (i32, i32) {
    %c0_i32 = arith.constant 0 : i32
    %c0_i32_0 = arith.constant 0 : i32
    %c0_i32_1 = arith.constant 0 : i32
    return %c0_i32, %c0_i32_0 : i32, i32
  }
  func.func @transform_10(%arg0: i32) -> (i32, i32) {
    %c0_i32 = arith.constant 0 : i32
    %c0_i32_0 = arith.constant 0 : i32
    %c0_i32_1 = arith.constant 0 : i32
    return %c0_i32, %c0_i32_0 : i32, i32
  }
  func.func @transform_11(%arg0: i32) -> (i32, i32) {
    %c0_i32 = arith.constant 0 : i32
    %c0_i32_0 = arith.constant 0 : i32
    %c0_i32_1 = arith.constant 0 : i32
    return %c0_i32, %c0_i32_0 : i32, i32
  }
  func.func @transform_12(%arg0: i32) -> (i32, i32) {
    %c0_i32 = arith.constant 0 : i32
    %c0_i32_0 = arith.constant 0 : i32
    %c0_i32_1 = arith.constant 0 : i32
    return %c0_i32, %c0_i32_0 : i32, i32
  }
}

module attributes {stable_mosaic.version = 11 : i64} {
  func.func @_matmul_bias_kernel(%arg0: i32, %arg1: i32, %arg2: i32, %arg3: memref<8x768xf32, #tpu.memory_space<vmem>>, %arg4: memref<768x128xbf16, #tpu.memory_space<vmem>>, %arg5: memref<1x128xf32, #tpu.memory_space<vmem>>, %arg6: memref<8x128xf32, #tpu.memory_space<vmem>>, %arg7: memref<8x128xf32, #tpu.memory_space<vmem>>) attributes {dimension_semantics = [#tpu.dimension_semantics<parallel>, #tpu.dimension_semantics<parallel>, #tpu.dimension_semantics<arbitrary>], iteration_bounds = array<i64: 1, 1, 1>, scalar_prefetch = 0 : i64, scratch_operands = 1 : i64, tpu.core_type = #tpu.core_type<tc>, window_params = [{transform_indices = @transform_0, window_bounds = array<i64: 8, 768>}, {transform_indices = @transform_1, window_bounds = array<i64: 768, 128>}, {transform_indices = @transform_2, window_bounds = array<i64: 1, 128>}, {transform_indices = @transform_3, window_bounds = array<i64: 8, 128>}]} {
    %c0_i32 = arith.constant 0 : i32
    %0 = arith.cmpi eq, %arg2, %c0_i32 : i32
    %1 = arith.extui %0 : i1 to i32
    %c0_i32_0 = arith.constant 0 : i32
    %2 = arith.cmpi ne, %1, %c0_i32_0 : i32
    scf.if %2 {
      %cst_10 = arith.constant 0.000000e+00 : f32
      %13 = vector.broadcast %cst_10 : f32 to vector<8x128xf32>
      %c0_11 = arith.constant 0 : index
      %c0_12 = arith.constant 0 : index
      %14 = vector.load %arg7[%c0_11, %c0_12] : memref<8x128xf32, #tpu.memory_space<vmem>>, vector<8x128xf32>
      tpu.vector_store %arg7[%c0_11, %c0_12], %13 {strides = array<i32>} : memref<8x128xf32, #tpu.memory_space<vmem>>, vector<8x128xf32>,
    } else {
    }
    %c0 = arith.constant 0 : index
    %c0_1 = arith.constant 0 : index
    %3 = vector.load %arg7[%c0, %c0_1] : memref<8x128xf32, #tpu.memory_space<vmem>>, vector<8x128xf32>
    %c0_2 = arith.constant 0 : index
    %c0_3 = arith.constant 0 : index
    %4 = vector.load %arg3[%c0_2, %c0_3] : memref<8x768xf32, #tpu.memory_space<vmem>>, vector<8x768xf32>
    %5 = arith.truncf %4 : vector<8x768xf32> to vector<8x768xbf16>
    %c0_4 = arith.constant 0 : index
    %c0_5 = arith.constant 0 : index
    %6 = vector.load %arg4[%c0_4, %c0_5] : memref<768x128xbf16, #tpu.memory_space<vmem>>, vector<768x128xbf16>
    %cst = arith.constant dense<0.000000e+00> : vector<8x128xf32>
    %7 = tpu.matmul %5, %6, %cst {dimension_numbers = #tpu.dot_dimension_numbers<[1], [0], [0], [1], [0, 0, 1, 1], [], []>} : vector<8x768xbf16>, vector<768x128xbf16>, vector<8x128xf32> -> vector<8x128xf32>
    %8 = arith.addf %3, %7 : vector<8x128xf32>
    %c0_6 = arith.constant 0 : index
    %c0_7 = arith.constant 0 : index
    %9 = vector.load %arg7[%c0_6, %c0_7] : memref<8x128xf32, #tpu.memory_space<vmem>>, vector<8x128xf32>
    tpu.vector_store %arg7[%c0_6, %c0_7], %8 {strides = array<i32>} : memref<8x128xf32, #tpu.memory_space<vmem>>, vector<8x128xf32>,
    %c0_i32_8 = arith.constant 0 : i32
    %10 = arith.cmpi eq, %arg2, %c0_i32_8 : i32
    %11 = arith.extui %10 : i1 to i32
    %c0_i32_9 = arith.constant 0 : i32
    %12 = arith.cmpi ne, %11, %c0_i32_9 : i32
    scf.if %12 {
      %c0_10 = arith.constant 0 : index
      %c0_11 = arith.constant 0 : index
      %13 = vector.load %arg7[%c0_10, %c0_11] : memref<8x128xf32, #tpu.memory_space<vmem>>, vector<8x128xf32>
      %c0_12 = arith.constant 0 : index
      %c0_13 = arith.constant 0 : index
      %14 = vector.load %arg5[%c0_12, %c0_13] : memref<1x128xf32, #tpu.memory_space<vmem>>, vector<1x128xf32>
      %15 = vector.broadcast %14 : vector<1x128xf32> to vector<8x128xf32>
      %16 = arith.addf %13, %15 : vector<8x128xf32>
      %c0_14 = arith.constant 0 : index
      %c0_15 = arith.constant 0 : index
      %17 = vector.load %arg6[%c0_14, %c0_15] : memref<8x128xf32, #tpu.memory_space<vmem>>, vector<8x128xf32>
      tpu.vector_store %arg6[%c0_14, %c0_15], %16 {strides = array<i32>} : memref<8x128xf32, #tpu.memory_space<vmem>>, vector<8x128xf32>,
    } else {
    }
    return
  }
  func.func @transform_0(%arg0: i32, %arg1: i32, %arg2: i32) -> (i32, i32) {
    %c0_i32 = arith.constant 0 : i32
    return %arg0, %arg2 : i32, i32
  }
  func.func @transform_1(%arg0: i32, %arg1: i32, %arg2: i32) -> (i32, i32) {
    %c0_i32 = arith.constant 0 : i32
    return %arg2, %arg1 : i32, i32
  }
  func.func @transform_2(%arg0: i32, %arg1: i32, %arg2: i32) -> (i32, i32) {
    %c0_i32 = arith.constant 0 : i32
    %c0_i32_0 = arith.constant 0 : i32
    return %c0_i32, %arg1 : i32, i32
  }
  func.func @transform_3(%arg0: i32, %arg1: i32, %arg2: i32) -> (i32, i32) {
    %c0_i32 = arith.constant 0 : i32
    return %arg0, %arg1 : i32, i32
  }
}

</mosaic_0001>

<llo_original>
// kernel: clip_gcn_forward.2
$region0: #{clip_gcn_forward.2}
  #allocation0 [shape = 'u32[]', space=smem, size = 0x4, offset = 0x4, fixed_abs, tag = 'smem constant byte address 0x4 - core index']
  #allocation1 [shape = 'u32[144,128]{1,0:T(1,128)}', space=vmem, size = 0x12000, scoped, tag = 'internal scratch']
  #allocation2 [shape = 'f32[8,128]{1,0:T(8,128)}', space=vmem, size = 0x1000, scoped, tag = 'scratch operand']
  %s0 = inlined_call_operand.vmem [shape: f32[8,768], index: 0, kind: input, shape index: {}]
  %s1 = inlined_call_operand.vmem [shape: bf16[768,128], index: 1, kind: input, shape index: {}]
  %s2 = inlined_call_operand.vmem [shape: f32[1,128], index: 2, kind: input, shape index: {}]
  %s3 = inlined_call_operand.vmem [shape: f32[8,128], index: 3, kind: output, shape index: {}]
  %s4 = sld [smem:[#allocation0]]
  $region30: #{clip_gcn_forward.2} parent=0
    _
  %s6 = ssub.s32 1, %s4
  %s7 = scalar_select 0, %s6, %s4
  // Predicated region
  $region2: #{clip_gcn_forward.2} parent=0 // pred_check
    _
  $region3: #{clip_gcn_forward.2} parent=0 // pred_check_branch
    %9 = sbr.rel (0) target = $region5
  $region4: #{clip_gcn_forward.2} parent=0 // pred_region
    _
  $region5: #{clip_gcn_forward.2} parent=0 // pred_fallthru
    _
  // Predicated region
  $region6: #{clip_gcn_forward.2} parent=0 // pred_check
    _
  $region7: #{clip_gcn_forward.2} parent=0 // pred_check_branch
    %11 = sbr.rel (0) target = $region9
  $region8: #{clip_gcn_forward.2} parent=0 // pred_region
    _
  $region9: #{clip_gcn_forward.2} parent=0 // pred_fallthru
    _
  // Predicated region
  $region10: #{clip_gcn_forward.2} parent=0 // pred_check
    _
  $region11: #{clip_gcn_forward.2} parent=0 // pred_check_branch
    %13 = sbr.rel (0) target = $region13
  $region12: #{clip_gcn_forward.2} parent=0 // pred_region
    _
  $region13: #{clip_gcn_forward.2} parent=0 // pred_fallthru
    _
  %p15 = scmp.eq.s32.totalorder 0, 0
  // Predicated region
  $region14: #{clip_gcn_forward.2} parent=0 // pred_check
    %p16 = pneg %p15
  $region15: #{clip_gcn_forward.2} parent=0 // pred_check_branch
    %18 = sbr.rel (%p16) target = $region17
  $region16: #{clip_gcn_forward.2} parent=0 // pred_region
    %19 = vst [vmem:[#allocation2] sm:$0xff] 0.0
  $region17: #{clip_gcn_forward.2} parent=0 // pred_fallthru
    _
  %v20 = vld [vmem:[#allocation2] sm:$0xff]
  %v21 = vld [vmem:[%s0] sm:$0xff]
  %v22 = vld [vmem:[%s0 + $0x8] sm:$0xff]
  %v23 = vld [vmem:[%s0 + $0x10] sm:$0xff]
  %v24 = vld [vmem:[%s0 + $0x18] sm:$0xff]
  %v25 = vld [vmem:[%s0 + $0x20] sm:$0xff]
  %v26 = vld [vmem:[%s0 + $0x28] sm:$0xff]
  %v27 = vpack.c.bf16 %v21, %v21
  %v28 = vpack.c.bf16 %v22, %v22
  %v29 = vpack.c.bf16 %v23, %v23
  %v30 = vpack.c.bf16 %v24, %v24
  %v31 = vpack.c.bf16 %v25, %v25
  %v32 = vpack.c.bf16 %v26, %v26
  %v33 = vld [vmem:[%s1] sm:$0xf]
  %v34 = vld [vmem:[%s1 + $0x4] sm:$0xf]
  %v35 = vld [vmem:[%s1 + $0x8] sm:$0xf]
  %v36 = vld [vmem:[%s1 + $0xc] sm:$0xf]
  %v37 = vld [vmem:[%s1 + $0x10] sm:$0xf]
  %v38 = vld [vmem:[%s1 + $0x14] sm:$0xf]
  %v39 = vld [vmem:[%s1 + $0x18] sm:$0xf]
  %v40 = vld [vmem:[%s1 + $0x1c] sm:$0xf]
  %v41 = vld [vmem:[%s1 + $0x20] sm:$0xf]
  %v42 = vld [vmem:[%s1 + $0x24] sm:$0xf]
  %v43 = vld [vmem:[%s1 + $0x28] sm:$0xf]
  %v44 = vld [vmem:[%s1 + $0x2c] sm:$0xf]
  %v45 = vld [vmem:[%s1 + $0x30] sm:$0xf]
  %v46 = vld [vmem:[%s1 + $0x34] sm:$0xf]
  %v47 = vld [vmem:[%s1 + $0x38] sm:$0xf]
  %v48 = vld [vmem:[%s1 + $0x3c] sm:$0xf]
  %v49 = vld [vmem:[%s1 + $0x40] sm:$0xf]
  %v50 = vld [vmem:[%s1 + $0x44] sm:$0xf]
  %v51 = vld [vmem:[%s1 + $0x48] sm:$0xf]
  %v52 = vld [vmem:[%s1 + $0x4c] sm:$0xf]
  %v53 = vld [vmem:[%s1 + $0x50] sm:$0xf]
  %v54 = vld [vmem:[%s1 + $0x54] sm:$0xf]
  %v55 = vld [vmem:[%s1 + $0x58] sm:$0xf]
  %v56 = vld [vmem:[%s1 + $0x5c] sm:$0xf]
  %v57 = vld [vmem:[%s1 + $0x60] sm:$0xf]
  %v58 = vld [vmem:[%s1 + $0x64] sm:$0xf]
  %v59 = vld [vmem:[%s1 + $0x68] sm:$0xf]
  %v60 = vld [vmem:[%s1 + $0x6c] sm:$0xf]
  %v61 = vld [vmem:[%s1 + $0x70] sm:$0xf]
  %v62 = vld [vmem:[%s1 + $0x74] sm:$0xf]
  %v63 = vld [vmem:[%s1 + $0x78] sm:$0xf]
  %v64 = vld [vmem:[%s1 + $0x7c] sm:$0xf]
  %v65 = vld [vmem:[%s1 + $0x80] sm:$0xf]
  %v66 = vld [vmem:[%s1 + $0x84] sm:$0xf]
  %v67 = vld [vmem:[%s1 + $0x88] sm:$0xf]
  %v68 = vld [vmem:[%s1 + $0x8c] sm:$0xf]
  %v69 = vld [vmem:[%s1 + $0x90] sm:$0xf]
  %v70 = vld [vmem:[%s1 + $0x94] sm:$0xf]
  %v71 = vld [vmem:[%s1 + $0x98] sm:$0xf]
  %v72 = vld [vmem:[%s1 + $0x9c] sm:$0xf]
  %v73 = vld [vmem:[%s1 + $0xa0] sm:$0xf]
  %v74 = vld [vmem:[%s1 + $0xa4] sm:$0xf]
  %v75 = vld [vmem:[%s1 + $0xa8] sm:$0xf]
  %v76 = vld [vmem:[%s1 + $0xac] sm:$0xf]
  %v77 = vld [vmem:[%s1 + $0xb0] sm:$0xf]
  %v78 = vld [vmem:[%s1 + $0xb4] sm:$0xf]
  %v79 = vld [vmem:[%s1 + $0xb8] sm:$0xf]
  %v80 = vld [vmem:[%s1 + $0xbc] sm:$0xf]
  %v81 = vld [vmem:[%s1 + $0xc0] sm:$0xf]
  %v82 = vld [vmem:[%s1 + $0xc4] sm:$0xf]
  %v83 = vld [vmem:[%s1 + $0xc8] sm:$0xf]
  %v84 = vld [vmem:[%s1 + $0xcc] sm:$0xf]
  %v85 = vld [vmem:[%s1 + $0xd0] sm:$0xf]
  %v86 = vld [vmem:[%s1 + $0xd4] sm:$0xf]
  %v87 = vld [vmem:[%s1 + $0xd8] sm:$0xf]
  %v88 = vld [vmem:[%s1 + $0xdc] sm:$0xf]
  %v89 = vld [vmem:[%s1 + $0xe0] sm:$0xf]
  %v90 = vld [vmem:[%s1 + $0xe4] sm:$0xf]
  %v91 = vld [vmem:[%s1 + $0xe8] sm:$0xf]
  %v92 = vld [vmem:[%s1 + $0xec] sm:$0xf]
  %v93 = vld [vmem:[%s1 + $0xf0] sm:$0xf]
  %v94 = vld [vmem:[%s1 + $0xf4] sm:$0xf]
  %v95 = vld [vmem:[%s1 + $0xf8] sm:$0xf]
  %v96 = vld [vmem:[%s1 + $0xfc] sm:$0xf]
  %v97 = vld [vmem:[%s1 + $0x100] sm:$0xf]
  %v98 = vld [vmem:[%s1 + $0x104] sm:$0xf]
  %v99 = vld [vmem:[%s1 + $0x108] sm:$0xf]
  %v100 = vld [vmem:[%s1 + $0x10c] sm:$0xf]
  %v101 = vld [vmem:[%s1 + $0x110] sm:$0xf]
  %v102 = vld [vmem:[%s1 + $0x114] sm:$0xf]
  %v103 = vld [vmem:[%s1 + $0x118] sm:$0xf]
  %v104 = vld [vmem:[%s1 + $0x11c] sm:$0xf]
  %v105 = vld [vmem:[%s1 + $0x120] sm:$0xf]
  %v106 = vld [vmem:[%s1 + $0x124] sm:$0xf]
  %v107 = vld [vmem:[%s1 + $0x128] sm:$0xf]
  %v108 = vld [vmem:[%s1 + $0x12c] sm:$0xf]
  %v109 = vld [vmem:[%s1 + $0x130] sm:$0xf]
  %v110 = vld [vmem:[%s1 + $0x134] sm:$0xf]
  %v111 = vld [vmem:[%s1 + $0x138] sm:$0xf]
  %v112 = vld [vmem:[%s1 + $0x13c] sm:$0xf]
  %v113 = vld [vmem:[%s1 + $0x140] sm:$0xf]
  %v114 = vld [vmem:[%s1 + $0x144] sm:$0xf]
  %v115 = vld [vmem:[%s1 + $0x148] sm:$0xf]
  %v116 = vld [vmem:[%s1 + $0x14c] sm:$0xf]
  %v117 = vld [vmem:[%s1 + $0x150] sm:$0xf]
  %v118 = vld [vmem:[%s1 + $0x154] sm:$0xf]
  %v119 = vld [vmem:[%s1 + $0x158] sm:$0xf]
  %v120 = vld [vmem:[%s1 + $0x15c] sm:$0xf]
  %v121 = vld [vmem:[%s1 + $0x160] sm:$0xf]
  %v122 = vld [vmem:[%s1 + $0x164] sm:$0xf]
  %v123 = vld [vmem:[%s1 + $0x168] sm:$0xf]
  %v124 = vld [vmem:[%s1 + $0x16c] sm:$0xf]
  %v125 = vld [vmem:[%s1 + $0x170] sm:$0xf]
  %v126 = vld [vmem:[%s1 + $0x174] sm:$0xf]
  %v127 = vld [vmem:[%s1 + $0x178] sm:$0xf]
  %v128 = vld [vmem:[%s1 + $0x17c] sm:$0xf]
  %v225 = vunpack.c.l.b16 %v33
  %v226 = vunpack.c.l.b16 %v34
  %v227 = vunpack.c.l.b16 %v35
  %v228 = vunpack.c.l.b16 %v36
  %v229 = vunpack.c.l.b16 %v37
  %v230 = vunpack.c.l.b16 %v38
  %v231 = vunpack.c.l.b16 %v39
  %v232 = vunpack.c.l.b16 %v40
  %v233 = vunpack.c.l.b16 %v41
  %v234 = vunpack.c.l.b16 %v42
  %v235 = vunpack.c.l.b16 %v43
  %v236 = vunpack.c.l.b16 %v44
  %v237 = vunpack.c.l.b16 %v45
  %v238 = vunpack.c.l.b16 %v46
  %v239 = vunpack.c.l.b16 %v47
  %v240 = vunpack.c.l.b16 %v48
  %v241 = vunpack.c.l.b16 %v49
  %v242 = vunpack.c.l.b16 %v50
  %v243 = vunpack.c.l.b16 %v51
  %v244 = vunpack.c.l.b16 %v52
  %v245 = vunpack.c.l.b16 %v53
  %v246 = vunpack.c.l.b16 %v54
  %v247 = vunpack.c.l.b16 %v55
  %v248 = vunpack.c.l.b16 %v56
  %v249 = vunpack.c.l.b16 %v57
  %v250 = vunpack.c.l.b16 %v58
  %v251 = vunpack.c.l.b16 %v59
  %v252 = vunpack.c.l.b16 %v60
  %v253 = vunpack.c.l.b16 %v61
  %v254 = vunpack.c.l.b16 %v62
  %v255 = vunpack.c.l.b16 %v63
  %v256 = vunpack.c.l.b16 %v64
  %v257 = vunpack.c.l.b16 %v65
  %v258 = vunpack.c.l.b16 %v66
  %v259 = vunpack.c.l.b16 %v67
  %v260 = vunpack.c.l.b16 %v68
  %v261 = vunpack.c.l.b16 %v69
  %v262 = vunpack.c.l.b16 %v70
  %v263 = vunpack.c.l.b16 %v71
  %v264 = vunpack.c.l.b16 %v72
  %v265 = vunpack.c.l.b16 %v73
  %v266 = vunpack.c.l.b16 %v74
  %v267 = vunpack.c.l.b16 %v75
  %v268 = vunpack.c.l.b16 %v76
  %v269 = vunpack.c.l.b16 %v77
  %v270 = vunpack.c.l.b16 %v78
  %v271 = vunpack.c.l.b16 %v79
  %v272 = vunpack.c.l.b16 %v80
  %v273 = vunpack.c.l.b16 %v81
  %v274 = vunpack.c.l.b16 %v82
  %v275 = vunpack.c.l.b16 %v83
  %v276 = vunpack.c.l.b16 %v84
  %v277 = vunpack.c.l.b16 %v85
  %v278 = vunpack.c.l.b16 %v86
  %v279 = vunpack.c.l.b16 %v87
  %v280 = vunpack.c.l.b16 %v88
  %v281 = vunpack.c.l.b16 %v89
  %v282 = vunpack.c.l.b16 %v90
  %v283 = vunpack.c.l.b16 %v91
  %v284 = vunpack.c.l.b16 %v92
  %v285 = vunpack.c.l.b16 %v93
  %v286 = vunpack.c.l.b16 %v94
  %v287 = vunpack.c.l.b16 %v95
  %v288 = vunpack.c.l.b16 %v96
  %v289 = vunpack.c.l.b16 %v97
  %v290 = vunpack.c.l.b16 %v98
  %v291 = vunpack.c.l.b16 %v99
  %v292 = vunpack.c.l.b16 %v100
  %v293 = vunpack.c.l.b16 %v101
  %v294 = vunpack.c.l.b16 %v102
  %v295 = vunpack.c.l.b16 %v103
  %v296 = vunpack.c.l.b16 %v104
  %v297 = vunpack.c.l.b16 %v105
  %v298 = vunpack.c.l.b16 %v106
  %v299 = vunpack.c.l.b16 %v107
  %v300 = vunpack.c.l.b16 %v108
  %v301 = vunpack.c.l.b16 %v109
  %v302 = vunpack.c.l.b16 %v110
  %v303 = vunpack.c.l.b16 %v111
  %v304 = vunpack.c.l.b16 %v112
  %v305 = vunpack.c.l.b16 %v113
  %v306 = vunpack.c.l.b16 %v114
  %v307 = vunpack.c.l.b16 %v115
  %v308 = vunpack.c.l.b16 %v116
  %v309 = vunpack.c.l.b16 %v117
  %v310 = vunpack.c.l.b16 %v118
  %v311 = vunpack.c.l.b16 %v119
  %v312 = vunpack.c.l.b16 %v120
  %v313 = vunpack.c.l.b16 %v121
  %v314 = vunpack.c.l.b16 %v122
  %v315 = vunpack.c.l.b16 %v123
  %v316 = vunpack.c.l.b16 %v124
  %v317 = vunpack.c.l.b16 %v125
  %v318 = vunpack.c.l.b16 %v126
  %v319 = vunpack.c.l.b16 %v127
  %v320 = vunpack.c.l.b16 %v128
  %v321 = vpack.c.b16 %v226, %v225
  %v322 = vpack.c.b16 %v228, %v227
  %v323 = vpack.c.b16 %v230, %v229
  %v324 = vpack.c.b16 %v232, %v231
  %v325 = vpack.c.b16 %v234, %v233
  %v326 = vpack.c.b16 %v236, %v235
  %v327 = vpack.c.b16 %v238, %v237
  %v328 = vpack.c.b16 %v240, %v239
  %v329 = vpack.c.b16 %v242, %v241
  %v330 = vpack.c.b16 %v244, %v243
  %v331 = vpack.c.b16 %v246, %v245
  %v332 = vpack.c.b16 %v248, %v247
  %v333 = vpack.c.b16 %v250, %v249
  %v334 = vpack.c.b16 %v252, %v251
  %v335 = vpack.c.b16 %v254, %v253
  %v336 = vpack.c.b16 %v256, %v255
  %v337 = vpack.c.b16 %v258, %v257
  %v338 = vpack.c.b16 %v260, %v259
  %v339 = vpack.c.b16 %v262, %v261
  %v340 = vpack.c.b16 %v264, %v263
  %v341 = vpack.c.b16 %v266, %v265
  %v342 = vpack.c.b16 %v268, %v267
  %v343 = vpack.c.b16 %v270, %v269
  %v344 = vpack.c.b16 %v272, %v271
  %v345 = vpack.c.b16 %v274, %v273
  %v346 = vpack.c.b16 %v276, %v275
  %v347 = vpack.c.b16 %v278, %v277
  %v348 = vpack.c.b16 %v280, %v279
  %v349 = vpack.c.b16 %v282, %v281
  %v350 = vpack.c.b16 %v284, %v283
  %v351 = vpack.c.b16 %v286, %v285
  %v352 = vpack.c.b16 %v288, %v287
  %v353 = vpack.c.b16 %v290, %v289
  %v354 = vpack.c.b16 %v292, %v291
  %v355 = vpack.c.b16 %v294, %v293
  %v356 = vpack.c.b16 %v296, %v295
  %v357 = vpack.c.b16 %v298, %v297
  %v358 = vpack.c.b16 %v300, %v299
  %v359 = vpack.c.b16 %v302, %v301
  %v360 = vpack.c.b16 %v304, %v303
  %v361 = vpack.c.b16 %v306, %v305
  %v362 = vpack.c.b16 %v308, %v307
  %v363 = vpack.c.b16 %v310, %v309
  %v364 = vpack.c.b16 %v312, %v311
  %v365 = vpack.c.b16 %v314, %v313
  %v366 = vpack.c.b16 %v316, %v315
  %v367 = vpack.c.b16 %v318, %v317
  %v368 = vpack.c.b16 %v320, %v319
  %417 = vmatprep.subr.bf16.mxu0 0
  %418 = vmatpush1.bf16.msra.mxu0 %v328
  %419 = vmatprep.subr.bf16.mxu0 0
  %420 = vmatpush1.bf16.msra.mxu0 %v327
  %421 = vmatprep.subr.bf16.mxu0 0
  %422 = vmatpush1.bf16.msra.mxu0 %v326
  %423 = vmatprep.subr.bf16.mxu0 0
  %424 = vmatpush1.bf16.msra.mxu0 %v325
  %425 = vmatprep.subr.bf16.mxu0 0
  %426 = vmatpush1.bf16.msra.mxu0 %v324
  %427 = vmatprep.subr.bf16.mxu0 0
  %428 = vmatpush1.bf16.msra.mxu0 %v323
  %429 = vmatprep.subr.bf16.mxu0 0
  %430 = vmatpush1.bf16.msra.mxu0 %v322
  %431 = vmatprep.subr.bf16.mxu0 0
  %432 = vmatpush1.bf16.msra.mxu0 %v321
  %433 = vmatprep.subr.bf16.mxu0 0
  %434 = vmatpush2.bf16.msra.mxu0 %v336
  %435 = vmatprep.subr.bf16.mxu0 0
  %436 = vmatpush2.bf16.msra.mxu0 %v335
  %437 = vmatprep.subr.bf16.mxu0 0
  %438 = vmatpush2.bf16.msra.mxu0 %v334
  %439 = vmatprep.subr.bf16.mxu0 0
  %440 = vmatpush2.bf16.msra.mxu0 %v333
  %441 = vmatprep.subr.bf16.mxu0 0
  %442 = vmatpush2.bf16.msra.mxu0 %v332
  %443 = vmatprep.subr.bf16.mxu0 0
  %444 = vmatpush2.bf16.msra.mxu0 %v331
  %445 = vmatprep.subr.bf16.mxu0 0
  %446 = vmatpush2.bf16.msra.mxu0 %v330
  %447 = vmatprep.subr.bf16.mxu0 0
  %448 = vmatpush2.bf16.msra.mxu0 %v329
  %449 = vmatprep.mubr.bf16.mxu0 %v28
  %450 = vmatmul.mubr.bf16.gmra.mxu0 %v27
  %v451 = vpop.f32.mrf.mxu0
  %v452 = vadd.f32 0.0, %v451
  %v453 = vpop.f32.mrf.mxu0
  %v454 = vpop.f32.mrf.mxu0
  %v455 = vpop.f32.mrf.mxu0
  %456 = vdwg.mxu0
  %457 = vmatprep.subr.bf16.mxu0 0
  %458 = vmatpush1.bf16.msra.mxu0 %v344
  %459 = vmatprep.subr.bf16.mxu0 0
  %460 = vmatpush1.bf16.msra.mxu0 %v343
  %461 = vmatprep.subr.bf16.mxu0 0
  %462 = vmatpush1.bf16.msra.mxu0 %v342
  %463 = vmatprep.subr.bf16.mxu0 0
  %464 = vmatpush1.bf16.msra.mxu0 %v341
  %465 = vmatprep.subr.bf16.mxu0 0
  %466 = vmatpush1.bf16.msra.mxu0 %v340
  %467 = vmatprep.subr.bf16.mxu0 0
  %468 = vmatpush1.bf16.msra.mxu0 %v339
  %469 = vmatprep.subr.bf16.mxu0 0
  %470 = vmatpush1.bf16.msra.mxu0 %v338
  %471 = vmatprep.subr.bf16.mxu0 0
  %472 = vmatpush1.bf16.msra.mxu0 %v337
  %473 = vmatprep.subr.bf16.mxu0 0
  %474 = vmatpush2.bf16.msra.mxu0 %v352
  %475 = vmatprep.subr.bf16.mxu0 0
  %476 = vmatpush2.bf16.msra.mxu0 %v351
  %477 = vmatprep.subr.bf16.mxu0 0
  %478 = vmatpush2.bf16.msra.mxu0 %v350
  %479 = vmatprep.subr.bf16.mxu0 0
  %480 = vmatpush2.bf16.msra.mxu0 %v349
  %481 = vmatprep.subr.bf16.mxu0 0
  %482 = vmatpush2.bf16.msra.mxu0 %v348
  %483 = vmatprep.subr.bf16.mxu0 0
  %484 = vmatpush2.bf16.msra.mxu0 %v347
  %485 = vmatprep.subr.bf16.mxu0 0
  %486 = vmatpush2.bf16.msra.mxu0 %v346
  %487 = vmatprep.subr.bf16.mxu0 0
  %488 = vmatpush2.bf16.msra.mxu0 %v345
  %489 = vmatprep.mubr.bf16.mxu0 %v30
  %490 = vmatmul.mubr.bf16.gmra.mxu0 %v29
  %v491 = vpop.f32.mrf.mxu0
  %v492 = vadd.f32 %v452, %v491
  %v493 = vpop.f32.mrf.mxu0
  %v494 = vpop.f32.mrf.mxu0
  %v495 = vpop.f32.mrf.mxu0
  %496 = vdwg.mxu0
  %497 = vmatprep.subr.bf16.mxu0 0
  %498 = vmatpush1.bf16.msra.mxu0 %v360
  %499 = vmatprep.subr.bf16.mxu0 0
  %500 = vmatpush1.bf16.msra.mxu0 %v359
  %501 = vmatprep.subr.bf16.mxu0 0
  %502 = vmatpush1.bf16.msra.mxu0 %v358
  %503 = vmatprep.subr.bf16.mxu0 0
  %504 = vmatpush1.bf16.msra.mxu0 %v357
  %505 = vmatprep.subr.bf16.mxu0 0
  %506 = vmatpush1.bf16.msra.mxu0 %v356
  %507 = vmatprep.subr.bf16.mxu0 0
  %508 = vmatpush1.bf16.msra.mxu0 %v355
  %509 = vmatprep.subr.bf16.mxu0 0
  %510 = vmatpush1.bf16.msra.mxu0 %v354
  %511 = vmatprep.subr.bf16.mxu0 0
  %512 = vmatpush1.bf16.msra.mxu0 %v353
  %513 = vmatprep.subr.bf16.mxu0 0
  %514 = vmatpush2.bf16.msra.mxu0 %v368
  %515 = vmatprep.subr.bf16.mxu0 0
  %516 = vmatpush2.bf16.msra.mxu0 %v367
  %517 = vmatprep.subr.bf16.mxu0 0
  %518 = vmatpush2.bf16.msra.mxu0 %v366
  %519 = vmatprep.subr.bf16.mxu0 0
  %520 = vmatpush2.bf16.msra.mxu0 %v365
  %521 = vmatprep.subr.bf16.mxu0 0
  %522 = vmatpush2.bf16.msra.mxu0 %v364
  %523 = vmatprep.subr.bf16.mxu0 0
  %524 = vmatpush2.bf16.msra.mxu0 %v363
  %525 = vmatprep.subr.bf16.mxu0 0
  %526 = vmatpush2.bf16.msra.mxu0 %v362
  %527 = vmatprep.subr.bf16.mxu0 0
  %528 = vmatpush2.bf16.msra.mxu0 %v361
  %529 = vmatprep.mubr.bf16.mxu0 %v32
  %530 = vmatmul.mubr.bf16.gmra.mxu0 %v31
  %v531 = vpop.f32.mrf.mxu0
  %v532 = vadd.f32 %v492, %v531
  %v533 = vpop.f32.mrf.mxu0
  %v534 = vpop.f32.mrf.mxu0
  %v535 = vpop.f32.mrf.mxu0
  %536 = vdwg.mxu0
  %v537 = vadd.f32 %v20, %v532
  %538 = vst [vmem:[#allocation2] sm:$0xff] %v537
  // Predicated region
  $region18: #{clip_gcn_forward.2} parent=0 // pred_check
    %p539 = pneg %p15
  $region19: #{clip_gcn_forward.2} parent=0 // pred_check_branch
    %541 = sbr.rel (%p539) target = $region21
  $region20: #{clip_gcn_forward.2} parent=0 // pred_region
    %v542 = vld [vmem:[#allocation2] sm:$0xff]
    %v543 = vld [vmem:[%s2] sm:$0x1]
    %v545 = vlaneseq
    %v546 = vshrl.u32 %v545, 7
    %v547 = vsub.s32 0, %v546
    %v548 = vrot.slane %v543, %v547
    %v550 = vadd.f32 %v542, %v548
    %551 = vst [vmem:[%s3] sm:$0xff] %v550
  $region21: #{clip_gcn_forward.2} parent=0 // pred_fallthru
    _
  // Predicated region
  $region22: #{clip_gcn_forward.2} parent=0 // pred_check
    _
  $region23: #{clip_gcn_forward.2} parent=0 // pred_check_branch
    %553 = sbr.rel (0) target = $region25
  $region24: #{clip_gcn_forward.2} parent=0 // pred_region
    _
  $region25: #{clip_gcn_forward.2} parent=0 // pred_fallthru
    _
  // Predicated region
  $region26: #{clip_gcn_forward.2} parent=0 // pred_check
    _
  $region27: #{clip_gcn_forward.2} parent=0 // pred_check_branch
    %555 = sbr.rel (0) target = $region29
  $region28: #{clip_gcn_forward.2} parent=0 // pred_region
    _
  $region29: #{clip_gcn_forward.2} parent=0 // pred_fallthru
    _

// kernel: clip_gcn_forward.3
$region0: #{clip_gcn_forward.3}
  #allocation0 [shape = 'u32[]', space=smem, size = 0x4, offset = 0x4, fixed_abs, tag = 'smem constant byte address 0x4 - core index']
  #allocation1 [shape = 'u32[144,128]{1,0:T(1,128)}', space=vmem, size = 0x12000, scoped, tag = 'internal scratch']
  %s0 = inlined_call_operand.vmem [shape: f32[8,128], index: 0, kind: input, shape index: {}]
  %s1 = inlined_call_operand.vmem [shape: s32[8,1], index: 1, kind: input, shape index: {}]
  %s2 = inlined_call_operand.vmem [shape: s32[1,8], index: 2, kind: input, shape index: {}]
  %s3 = inlined_call_operand.vmem [shape: bf16[128,128], index: 3, kind: input, shape index: {}]
  %s4 = inlined_call_operand.vmem [shape: f32[1,128], index: 4, kind: input, shape index: {}]
  %s5 = inlined_call_operand.vmem [shape: bf16[128,128], index: 5, kind: input, shape index: {}]
  %s6 = inlined_call_operand.vmem [shape: f32[1,128], index: 6, kind: input, shape index: {}]
  %s7 = inlined_call_operand.vmem [shape: bf16[128,128], index: 7, kind: input, shape index: {}]
  %s8 = inlined_call_operand.vmem [shape: bf16[128,128], index: 8, kind: input, shape index: {}]
  %s9 = inlined_call_operand.vmem [shape: f32[1,128], index: 9, kind: input, shape index: {}]
  %s10 = inlined_call_operand.hbm [shape: f32[8,256], index: 10, kind: output, shape index: {0}]
  %s11 = inlined_call_operand.vmem [shape: f32[8,128], index: 11, kind: output, shape index: {1}]
  %s12 = inlined_call_operand.hbm [shape: f32[8,8], index: 12, kind: output, shape index: {2}]
  %13 = xla_tuple %s10, %s11, %s12
  %s14 = sld [smem:[#allocation0]]
  $region66: #{clip_gcn_forward.3} parent=0
    _
  %s16 = ssub.s32 1, %s14
  %s17 = scalar_select 0, %s16, %s14
  $region1: #{clip_gcn_forward.3} parent=0
    #allocation2 [shape = 'u8[8192]{0}', space=vmem, size = 0x2000, scoped, tag = 'output window, operand 0, single buffered']
    #allocation3 [shape = 's32[1]{0}', space=sflag, size = 0x4, scoped, tag = 'scoped memory for clip_gcn_forward.3']
    #allocation4 [shape = 'u8[4096]{0}', space=vmem, size = 0x1000, scoped, tag = 'output window, operand 2, single buffered']
    #allocation5 [shape = 's32[1]{0}', space=sflag, size = 0x4, scoped, tag = 'scoped memory for clip_gcn_forward.3']
    %18 = vsyncpa [#allocation3], 0
    %19 = vsyncpa [#allocation5], 0
    // Predicated region
    $region2: #{clip_gcn_forward.3} parent=1 // pred_check
      _
    $region3: #{clip_gcn_forward.3} parent=1 // pred_check_branch
      %21 = sbr.rel (0) target = $region5
    $region4: #{clip_gcn_forward.3} parent=1 // pred_region
      _
    $region5: #{clip_gcn_forward.3} parent=1 // pred_fallthru
      _
    // Predicated region
    $region6: #{clip_gcn_forward.3} parent=1 // pred_check
      _
    $region7: #{clip_gcn_forward.3} parent=1 // pred_check_branch
      %23 = sbr.rel (0) target = $region9
    $region8: #{clip_gcn_forward.3} parent=1 // pred_region
      _
    $region9: #{clip_gcn_forward.3} parent=1 // pred_fallthru
      _
    // Predicated region
    $region10: #{clip_gcn_forward.3} parent=1 // pred_check
      _
    $region11: #{clip_gcn_forward.3} parent=1 // pred_check_branch
      %25 = sbr.rel (0) target = $region13
    $region12: #{clip_gcn_forward.3} parent=1 // pred_region
      _
    $region13: #{clip_gcn_forward.3} parent=1 // pred_fallthru
      _
    // Predicated region
    $region14: #{clip_gcn_forward.3} parent=1 // pred_check
      _
    $region15: #{clip_gcn_forward.3} parent=1 // pred_check_branch
      %27 = sbr.rel (0) target = $region17
    $region16: #{clip_gcn_forward.3} parent=1 // pred_region
      _
    $region17: #{clip_gcn_forward.3} parent=1 // pred_fallthru
      _
    // Predicated region
    $region18: #{clip_gcn_forward.3} parent=1 // pred_check
      _
    $region19: #{clip_gcn_forward.3} parent=1 // pred_check_branch
      %29 = sbr.rel (0) target = $region21
    $region20: #{clip_gcn_forward.3} parent=1 // pred_region
      _
    $region21: #{clip_gcn_forward.3} parent=1 // pred_fallthru
      _
    // Predicated region
    $region22: #{clip_gcn_forward.3} parent=1 // pred_check
      _
    $region23: #{clip_gcn_forward.3} parent=1 // pred_check_branch
      %31 = sbr.rel (0) target = $region25
    $region24: #{clip_gcn_forward.3} parent=1 // pred_region
      _
    $region25: #{clip_gcn_forward.3} parent=1 // pred_fallthru
      _
    // Predicated region
    $region26: #{clip_gcn_forward.3} parent=1 // pred_check
      _
    $region27: #{clip_gcn_forward.3} parent=1 // pred_check_branch
      %33 = sbr.rel (0) target = $region29
    $region28: #{clip_gcn_forward.3} parent=1 // pred_region
      _
    $region29: #{clip_gcn_forward.3} parent=1 // pred_fallthru
      _
    // Predicated region
    $region30: #{clip_gcn_forward.3} parent=1 // pred_check
      _
    $region31: #{clip_gcn_forward.3} parent=1 // pred_check_branch
      %35 = sbr.rel (0) target = $region33
    $region32: #{clip_gcn_forward.3} parent=1 // pred_region
      _
    $region33: #{clip_gcn_forward.3} parent=1 // pred_fallthru
      _
    // Predicated region
    $region34: #{clip_gcn_forward.3} parent=1 // pred_check
      _
    $region35: #{clip_gcn_forward.3} parent=1 // pred_check_branch
      %37 = sbr.rel (0) target = $region37
    $region36: #{clip_gcn_forward.3} parent=1 // pred_region
      _
    $region37: #{clip_gcn_forward.3} parent=1 // pred_fallthru
      _
    // Predicated region
    $region38: #{clip_gcn_forward.3} parent=1 // pred_check
      _
    $region39: #{clip_gcn_forward.3} parent=1 // pred_check_branch
      %39 = sbr.rel (0) target = $region41
    $region40: #{clip_gcn_forward.3} parent=1 // pred_region
      _
    $region41: #{clip_gcn_forward.3} parent=1 // pred_fallthru
      _
    %v41 = vld [vmem:[%s0] sm:$0xff]
    %v42 = vpack.c.bf16 %v41, %v41
    %43 = vmatprep.subr.bf16.mxu0 0
    %44 = vmatpush1.bf16.xpose.msra.mxu0 0
    %45 = vmatprep.subr.bf16.mxu0 0
    %46 = vmatpush1.bf16.xpose.msra.mxu0 0
    %47 = vmatprep.subr.bf16.mxu0 0
    %48 = vmatpush1.bf16.xpose.msra.mxu0 0
    %49 = vmatprep.subr.bf16.mxu0 0
    %50 = vmatpush1.bf16.xpose.msra.mxu0 0
    %51 = vmatprep.subr.bf16.mxu0 0
    %52 = vmatpush1.bf16.xpose.msra.mxu0 0
    %53 = vmatprep.subr.bf16.mxu0 0
    %54 = vmatpush1.bf16.xpose.msra.mxu0 0
    %55 = vmatprep.subr.bf16.mxu0 0
    %56 = vmatpush1.bf16.xpose.msra.mxu0 0
    %57 = vmatprep.subr.bf16.mxu0 0
    %58 = vmatpush1.bf16.xpose.msra.mxu0 %v42
    %59 = vmatprep.subr.bf16.mxu0 0
    %60 = vmatpush2.bf16.xpose.msra.mxu0 0
    %61 = vmatprep.subr.bf16.mxu0 0
    %62 = vmatpush2.bf16.xpose.msra.mxu0 0
    %63 = vmatprep.subr.bf16.mxu0 0
    %64 = vmatpush2.bf16.xpose.msra.mxu0 0
    %65 = vmatprep.subr.bf16.mxu0 0
    %66 = vmatpush2.bf16.xpose.msra.mxu0 0
    %67 = vmatprep.subr.bf16.mxu0 0
    %68 = vmatpush2.bf16.xpose.msra.mxu0 0
    %69 = vmatprep.subr.bf16.mxu0 0
    %70 = vmatpush2.bf16.xpose.msra.mxu0 0
    %71 = vmatprep.subr.bf16.mxu0 0
    %72 = vmatpush2.bf16.xpose.msra.mxu0 0
    %73 = vmatprep.subr.bf16.mxu0 0
    %74 = vmatpush2.bf16.xpose.msra.mxu0 0
    %75 = vmatprep.mubr.bf16.mxu0 0
    %76 = vmatmul.mubr.bf16.gmra.mxu0 %v42
    %v77 = vpop.f32.mrf.mxu0
    %v78 = vadd.f32 0.0, %v77
    %v79 = vpop.f32.mrf.mxu0
    %v80 = vpop.f32.mrf.mxu0
    %v81 = vpop.f32.mrf.mxu0
    %82 = vdwg.mxu0
    %v83 = vld [vmem:[%s1] sm:$0xff]
    %v84 = vld [vmem:[%s2] sm:$0x1]
    %85 = vset.pattern.permute.xlu0 0
    %86 = vperm.xlu0 %85, %v83
    %v87 = vpop.permute.xlu0 %86
    %v88 = vlaneseq
    %v89 = vshrl.u32 %v88, 7
    %v90 = vsub.s32 0, %v89
    %v91 = vrot.slane %v84, %v90
    %vm92 = vcmp.eq.s32.totalorder %v87, %v91
    %vm93 = vmxor %vm92, 1
    %v94 = vsel %vm93, 1, 0
    %v95 = vcvt.s32.f32 %v94
    %vm96 = vcmask 64512
    %v97 = vsel %vm96, %v95, 0.0
    %98 = vadd.xlane.f32.xlu0 %v97
    %v99 = vpop.xlane.xlu0 %98
    %v100 = vrot.slane %v99, 4
    %v101 = vadd.f32 %v99, %v100
    %v102 = vrot.slane %v101, 2
    %v103 = vadd.f32 %v101, %v102
    %v104 = vrot.slane %v103, 1
    %v105 = vadd.f32 %v103, %v104
    %s106 = vtos %v105
    %v107 = vsel %vm93, %v78, 0.0
    %v108 = vsel %vm96, %v107, 0.0
    %109 = vadd.xlane.f32.xlu0 %v108
    %v110 = vpop.xlane.xlu0 %109
    %v111 = vrot.slane %v110, 4
    %v112 = vadd.f32 %v110, %v111
    %v113 = vrot.slane %v112, 2
    %v114 = vadd.f32 %v112, %v113
    %v115 = vrot.slane %v114, 1
    %v116 = vadd.f32 %v114, %v115
    %s117 = vtos %v116
    %p118 = scmp.gt.f32.partialorder %s106, 0.0
    %s119 = smax.f32 %s106, 1.0
    %v120 = vstv %s119
    %v121 = vrcp.pop %v120
    %s122 = vtos %v121
    %s123 = smul.f32 %s117, %s122
    %s124 = scalar_select %p118, %s123, 0.0
    %v125 = vlaneseq
    %v126 = vshrl.u32 %v125, 7
    %v127 = vlaneseq
    %v128 = vand.u32 %v127, 127
    %vm129 = vcmp.eq.s32.totalorder %v126, %v128
    %vm130 = vmxor %vm129, 1
    %vm131 = vmand %vm92, %vm130
    %v132 = vstv %s124
    %vm133 = vcmp.le.f32.partialorder %v78, %v132
    %vm134 = vmand %vm131, %vm133
    %v135 = vsel %vm134, 1, 0
    %v136 = vcvt.s32.f32 %v135
    %v137 = vsel %vm129, 1, 0
    %v138 = vcvt.s32.f32 %v137
    %v139 = vadd.f32 %v136, %v138
    %v140 = vsel %vm96, %v139, 0.0
    %141 = vadd.xlane.f32.xlu0 %v140
    %v142 = vpop.xlane.xlu0 %141
    %v143 = vrsqrt.pop %v142
    %v144 = vpack.c.bf16 %v139, %v139
    %v145 = vld [vmem:[%s3] sm:$0xf]
    %v146 = vld [vmem:[%s3 + $0x4] sm:$0xf]
    %v147 = vld [vmem:[%s3 + $0x8] sm:$0xf]
    %v148 = vld [vmem:[%s3 + $0xc] sm:$0xf]
    %v149 = vld [vmem:[%s3 + $0x10] sm:$0xf]
    %v150 = vld [vmem:[%s3 + $0x14] sm:$0xf]
    %v151 = vld [vmem:[%s3 + $0x18] sm:$0xf]
    %v152 = vld [vmem:[%s3 + $0x1c] sm:$0xf]
    %v153 = vld [vmem:[%s3 + $0x20] sm:$0xf]
    %v154 = vld [vmem:[%s3 + $0x24] sm:$0xf]
    %v155 = vld [vmem:[%s3 + $0x28] sm:$0xf]
    %v156 = vld [vmem:[%s3 + $0x2c] sm:$0xf]
    %v157 = vld [vmem:[%s3 + $0x30] sm:$0xf]
    %v158 = vld [vmem:[%s3 + $0x34] sm:$0xf]
    %v159 = vld [vmem:[%s3 + $0x38] sm:$0xf]
    %v160 = vld [vmem:[%s3 + $0x3c] sm:$0xf]
    %v177 = vunpack.c.l.b16 %v145
    %v178 = vunpack.c.l.b16 %v146
    %v179 = vunpack.c.l.b16 %v147
    %v180 = vunpack.c.l.b16 %v148
    %v181 = vunpack.c.l.b16 %v149
    %v182 = vunpack.c.l.b16 %v150
    %v183 = vunpack.c.l.b16 %v151
    %v184 = vunpack.c.l.b16 %v152
    %v185 = vunpack.c.l.b16 %v153
    %v186 = vunpack.c.l.b16 %v154
    %v187 = vunpack.c.l.b16 %v155
    %v188 = vunpack.c.l.b16 %v156
    %v189 = vunpack.c.l.b16 %v157
    %v190 = vunpack.c.l.b16 %v158
    %v191 = vunpack.c.l.b16 %v159
    %v192 = vunpack.c.l.b16 %v160
    %v193 = vpack.c.b16 %v178, %v177
    %v194 = vpack.c.b16 %v180, %v179
    %v195 = vpack.c.b16 %v182, %v181
    %v196 = vpack.c.b16 %v184, %v183
    %v197 = vpack.c.b16 %v186, %v185
    %v198 = vpack.c.b16 %v188, %v187
    %v199 = vpack.c.b16 %v190, %v189
    %v200 = vpack.c.b16 %v192, %v191
    %209 = vmatprep.subr.bf16.mxu0 0
    %210 = vmatpush1.bf16.msra.mxu0 %v200
    %211 = vmatprep.subr.bf16.mxu0 0
    %212 = vmatpush1.bf16.msra.mxu0 %v199
    %213 = vmatprep.subr.bf16.mxu0 0
    %214 = vmatpush1.bf16.msra.mxu0 %v198
    %215 = vmatprep.subr.bf16.mxu0 0
    %216 = vmatpush1.bf16.msra.mxu0 %v197
    %217 = vmatprep.subr.bf16.mxu0 0
    %218 = vmatpush1.bf16.msra.mxu0 %v196
    %219 = vmatprep.subr.bf16.mxu0 0
    %220 = vmatpush1.bf16.msra.mxu0 %v195
    %221 = vmatprep.subr.bf16.mxu0 0
    %222 = vmatpush1.bf16.msra.mxu0 %v194
    %223 = vmatprep.subr.bf16.mxu0 0
    %224 = vmatpush1.bf16.msra.mxu0 %v193
    %225 = vmatprep.subr.bf16.mxu0 0
    %226 = vmatpush2.bf16.msra.mxu0 0
    %227 = vmatprep.subr.bf16.mxu0 0
    %228 = vmatpush2.bf16.msra.mxu0 0
    %229 = vmatprep.subr.bf16.mxu0 0
    %230 = vmatpush2.bf16.msra.mxu0 0
    %231 = vmatprep.subr.bf16.mxu0 0
    %232 = vmatpush2.bf16.msra.mxu0 0
    %233 = vmatprep.subr.bf16.mxu0 0
    %234 = vmatpush2.bf16.msra.mxu0 0
    %235 = vmatprep.subr.bf16.mxu0 0
    %236 = vmatpush2.bf16.msra.mxu0 0
    %237 = vmatprep.subr.bf16.mxu0 0
    %238 = vmatpush2.bf16.msra.mxu0 0
    %239 = vmatprep.subr.bf16.mxu0 0
    %240 = vmatpush2.bf16.msra.mxu0 0
    %241 = vmatprep.mubr.bf16.mxu0 0
    %242 = vmatmul.mubr.bf16.gmra.mxu0 %v42
    %v243 = vpop.f32.mrf.mxu0
    %v244 = vadd.f32 0.0, %v243
    %v245 = vpop.f32.mrf.mxu0
    %v246 = vpop.f32.mrf.mxu0
    %v247 = vpop.f32.mrf.mxu0
    %248 = vdwg.mxu0
    %v249 = vmul.f32 %v143, %v244
    %v250 = vpack.c.bf16 %v249, %v249
    %v252 = vsel %vm96, %v144, 0
    %vm254 = vcmask 1043456
    %v256 = vsel %vm254, %v250, 0
    %258 = vmatprep.subr.bf16.mxu0 0
    %259 = vmatpush1.bf16.msra.mxu0 0
    %260 = vmatprep.subr.bf16.mxu0 0
    %261 = vmatpush1.bf16.msra.mxu0 0
    %262 = vmatprep.subr.bf16.mxu0 0
    %263 = vmatpush1.bf16.msra.mxu0 0
    %264 = vmatprep.subr.bf16.mxu0 0
    %265 = vmatpush1.bf16.msra.mxu0 0
    %266 = vmatprep.subr.bf16.mxu0 0
    %267 = vmatpush1.bf16.msra.mxu0 0
    %268 = vmatprep.subr.bf16.mxu0 0
    %269 = vmatpush1.bf16.msra.mxu0 0
    %270 = vmatprep.subr.bf16.mxu0 0
    %271 = vmatpush1.bf16.msra.mxu0 0
    %272 = vmatprep.subr.bf16.mxu0 0
    %273 = vmatpush1.bf16.msra.mxu0 %v256
    %274 = vmatprep.subr.bf16.mxu0 0
    %275 = vmatpush2.bf16.msra.mxu0 0
    %276 = vmatprep.subr.bf16.mxu0 0
    %277 = vmatpush2.bf16.msra.mxu0 0
    %278 = vmatprep.subr.bf16.mxu0 0
    %279 = vmatpush2.bf16.msra.mxu0 0
    %280 = vmatprep.subr.bf16.mxu0 0
    %281 = vmatpush2.bf16.msra.mxu0 0
    %282 = vmatprep.subr.bf16.mxu0 0
    %283 = vmatpush2.bf16.msra.mxu0 0
    %284 = vmatprep.subr.bf16.mxu0 0
    %285 = vmatpush2.bf16.msra.mxu0 0
    %286 = vmatprep.subr.bf16.mxu0 0
    %287 = vmatpush2.bf16.msra.mxu0 0
    %288 = vmatprep.subr.bf16.mxu0 0
    %289 = vmatpush2.bf16.msra.mxu0 0
    %290 = vmatprep.mubr.bf16.mxu0 0
    %291 = vmatmul.mubr.bf16.gmra.mxu0 %v252
    %v292 = vpop.f32.mrf.mxu0
    %v293 = vadd.f32 0.0, %v292
    %v294 = vpop.f32.mrf.mxu0
    %v295 = vpop.f32.mrf.mxu0
    %v296 = vpop.f32.mrf.mxu0
    %297 = vdwg.mxu0
    %v298 = vmul.f32 %v143, %v293
    %v299 = vld [vmem:[%s4] sm:$0x1]
    %v301 = vlaneseq
    %v302 = vshrl.u32 %v301, 7
    %v303 = vsub.s32 0, %v302
    %v304 = vrot.slane %v299, %v303
    %v306 = vadd.f32 %v298, %v304
    %v307 = vmax.f32 %v306, 0.0
    %v308 = vpack.c.bf16 %v307, %v307
    %v309 = vld [vmem:[%s5] sm:$0xf]
    %v310 = vld [vmem:[%s5 + $0x4] sm:$0xf]
    %v311 = vld [vmem:[%s5 + $0x8] sm:$0xf]
    %v312 = vld [vmem:[%s5 + $0xc] sm:$0xf]
    %v313 = vld [vmem:[%s5 + $0x10] sm:$0xf]
    %v314 = vld [vmem:[%s5 + $0x14] sm:$0xf]
    %v315 = vld [vmem:[%s5 + $0x18] sm:$0xf]
    %v316 = vld [vmem:[%s5 + $0x1c] sm:$0xf]
    %v317 = vld [vmem:[%s5 + $0x20] sm:$0xf]
    %v318 = vld [vmem:[%s5 + $0x24] sm:$0xf]
    %v319 = vld [vmem:[%s5 + $0x28] sm:$0xf]
    %v320 = vld [vmem:[%s5 + $0x2c] sm:$0xf]
    %v321 = vld [vmem:[%s5 + $0x30] sm:$0xf]
    %v322 = vld [vmem:[%s5 + $0x34] sm:$0xf]
    %v323 = vld [vmem:[%s5 + $0x38] sm:$0xf]
    %v324 = vld [vmem:[%s5 + $0x3c] sm:$0xf]
    %v341 = vunpack.c.l.b16 %v309
    %v342 = vunpack.c.l.b16 %v310
    %v343 = vunpack.c.l.b16 %v311
    %v344 = vunpack.c.l.b16 %v312
    %v345 = vunpack.c.l.b16 %v313
    %v346 = vunpack.c.l.b16 %v314
    %v347 = vunpack.c.l.b16 %v315
    %v348 = vunpack.c.l.b16 %v316
    %v349 = vunpack.c.l.b16 %v317
    %v350 = vunpack.c.l.b16 %v318
    %v351 = vunpack.c.l.b16 %v319
    %v352 = vunpack.c.l.b16 %v320
    %v353 = vunpack.c.l.b16 %v321
    %v354 = vunpack.c.l.b16 %v322
    %v355 = vunpack.c.l.b16 %v323
    %v356 = vunpack.c.l.b16 %v324
    %v357 = vpack.c.b16 %v342, %v341
    %v358 = vpack.c.b16 %v344, %v343
    %v359 = vpack.c.b16 %v346, %v345
    %v360 = vpack.c.b16 %v348, %v347
    %v361 = vpack.c.b16 %v350, %v349
    %v362 = vpack.c.b16 %v352, %v351
    %v363 = vpack.c.b16 %v354, %v353
    %v364 = vpack.c.b16 %v356, %v355
    %373 = vmatprep.subr.bf16.mxu0 0
    %374 = vmatpush1.bf16.msra.mxu0 %v364
    %375 = vmatprep.subr.bf16.mxu0 0
    %376 = vmatpush1.bf16.msra.mxu0 %v363
    %377 = vmatprep.subr.bf16.mxu0 0
    %378 = vmatpush1.bf16.msra.mxu0 %v362
    %379 = vmatprep.subr.bf16.mxu0 0
    %380 = vmatpush1.bf16.msra.mxu0 %v361
    %381 = vmatprep.subr.bf16.mxu0 0
    %382 = vmatpush1.bf16.msra.mxu0 %v360
    %383 = vmatprep.subr.bf16.mxu0 0
    %384 = vmatpush1.bf16.msra.mxu0 %v359
    %385 = vmatprep.subr.bf16.mxu0 0
    %386 = vmatpush1.bf16.msra.mxu0 %v358
    %387 = vmatprep.subr.bf16.mxu0 0
    %388 = vmatpush1.bf16.msra.mxu0 %v357
    %389 = vmatprep.subr.bf16.mxu0 0
    %390 = vmatpush2.bf16.msra.mxu0 0
    %391 = vmatprep.subr.bf16.mxu0 0
    %392 = vmatpush2.bf16.msra.mxu0 0
    %393 = vmatprep.subr.bf16.mxu0 0
    %394 = vmatpush2.bf16.msra.mxu0 0
    %395 = vmatprep.subr.bf16.mxu0 0
    %396 = vmatpush2.bf16.msra.mxu0 0
    %397 = vmatprep.subr.bf16.mxu0 0
    %398 = vmatpush2.bf16.msra.mxu0 0
    %399 = vmatprep.subr.bf16.mxu0 0
    %400 = vmatpush2.bf16.msra.mxu0 0
    %401 = vmatprep.subr.bf16.mxu0 0
    %402 = vmatpush2.bf16.msra.mxu0 0
    %403 = vmatprep.subr.bf16.mxu0 0
    %404 = vmatpush2.bf16.msra.mxu0 0
    %405 = vmatprep.mubr.bf16.mxu0 0
    %406 = vmatmul.mubr.bf16.gmra.mxu0 %v308
    %v407 = vpop.f32.mrf.mxu0
    %v408 = vadd.f32 0.0, %v407
    %v409 = vpop.f32.mrf.mxu0
    %v410 = vpop.f32.mrf.mxu0
    %v411 = vpop.f32.mrf.mxu0
    %412 = vdwg.mxu0
    %v413 = vmul.f32 %v143, %v408
    %v414 = vpack.c.bf16 %v413, %v413
    %v416 = vsel %vm254, %v414, 0
    %418 = vmatprep.subr.bf16.mxu0 0
    %419 = vmatpush1.bf16.msra.mxu0 0
    %420 = vmatprep.subr.bf16.mxu0 0
    %421 = vmatpush1.bf16.msra.mxu0 0
    %422 = vmatprep.subr.bf16.mxu0 0
    %423 = vmatpush1.bf16.msra.mxu0 0
    %424 = vmatprep.subr.bf16.mxu0 0
    %425 = vmatpush1.bf16.msra.mxu0 0
    %426 = vmatprep.subr.bf16.mxu0 0
    %427 = vmatpush1.bf16.msra.mxu0 0
    %428 = vmatprep.subr.bf16.mxu0 0
    %429 = vmatpush1.bf16.msra.mxu0 0
    %430 = vmatprep.subr.bf16.mxu0 0
    %431 = vmatpush1.bf16.msra.mxu0 0
    %432 = vmatprep.subr.bf16.mxu0 0
    %433 = vmatpush1.bf16.msra.mxu0 %v416
    %434 = vmatprep.subr.bf16.mxu0 0
    %435 = vmatpush2.bf16.msra.mxu0 0
    %436 = vmatprep.subr.bf16.mxu0 0
    %437 = vmatpush2.bf16.msra.mxu0 0
    %438 = vmatprep.subr.bf16.mxu0 0
    %439 = vmatpush2.bf16.msra.mxu0 0
    %440 = vmatprep.subr.bf16.mxu0 0
    %441 = vmatpush2.bf16.msra.mxu0 0
    %442 = vmatprep.subr.bf16.mxu0 0
    %443 = vmatpush2.bf16.msra.mxu0 0
    %444 = vmatprep.subr.bf16.mxu0 0
    %445 = vmatpush2.bf16.msra.mxu0 0
    %446 = vmatprep.subr.bf16.mxu0 0
    %447 = vmatpush2.bf16.msra.mxu0 0
    %448 = vmatprep.subr.bf16.mxu0 0
    %449 = vmatpush2.bf16.msra.mxu0 0
    %450 = vmatprep.mubr.bf16.mxu0 0
    %451 = vmatmul.mubr.bf16.gmra.mxu0 %v252
    %v452 = vpop.f32.mrf.mxu0
    %v453 = vadd.f32 0.0, %v452
    %v454 = vpop.f32.mrf.mxu0
    %v455 = vpop.f32.mrf.mxu0
    %v456 = vpop.f32.mrf.mxu0
    %457 = vdwg.mxu0
    %v458 = vmul.f32 %v143, %v453
    %v459 = vld [vmem:[%s6] sm:$0x1]
    %v461 = vlaneseq
    %v462 = vshrl.u32 %v461, 7
    %v463 = vsub.s32 0, %v462
    %v464 = vrot.slane %v459, %v463
    %v466 = vadd.f32 %v458, %v464
    %v467 = vld [vmem:[%s7] sm:$0xf]
    %v468 = vld [vmem:[%s7 + $0x4] sm:$0xf]
    %v469 = vld [vmem:[%s7 + $0x8] sm:$0xf]
    %v470 = vld [vmem:[%s7 + $0xc] sm:$0xf]
    %v471 = vld [vmem:[%s7 + $0x10] sm:$0xf]
    %v472 = vld [vmem:[%s7 + $0x14] sm:$0xf]
    %v473 = vld [vmem:[%s7 + $0x18] sm:$0xf]
    %v474 = vld [vmem:[%s7 + $0x1c] sm:$0xf]
    %v475 = vld [vmem:[%s7 + $0x20] sm:$0xf]
    %v476 = vld [vmem:[%s7 + $0x24] sm:$0xf]
    %v477 = vld [vmem:[%s7 + $0x28] sm:$0xf]
    %v478 = vld [vmem:[%s7 + $0x2c] sm:$0xf]
    %v479 = vld [vmem:[%s7 + $0x30] sm:$0xf]
    %v480 = vld [vmem:[%s7 + $0x34] sm:$0xf]
    %v481 = vld [vmem:[%s7 + $0x38] sm:$0xf]
    %v482 = vld [vmem:[%s7 + $0x3c] sm:$0xf]
    %v483 = vpack.c.bf16 %v466, %v466
    %v484 = vld [vmem:[%s8] sm:$0xf]
    %v485 = vld [vmem:[%s8 + $0x4] sm:$0xf]
    %v486 = vld [vmem:[%s8 + $0x8] sm:$0xf]
    %v487 = vld [vmem:[%s8 + $0xc] sm:$0xf]
    %v488 = vld [vmem:[%s8 + $0x10] sm:$0xf]
    %v489 = vld [vmem:[%s8 + $0x14] sm:$0xf]
    %v490 = vld [vmem:[%s8 + $0x18] sm:$0xf]
    %v491 = vld [vmem:[%s8 + $0x1c] sm:$0xf]
    %v492 = vld [vmem:[%s8 + $0x20] sm:$0xf]
    %v493 = vld [vmem:[%s8 + $0x24] sm:$0xf]
    %v494 = vld [vmem:[%s8 + $0x28] sm:$0xf]
    %v495 = vld [vmem:[%s8 + $0x2c] sm:$0xf]
    %v496 = vld [vmem:[%s8 + $0x30] sm:$0xf]
    %v497 = vld [vmem:[%s8 + $0x34] sm:$0xf]
    %v498 = vld [vmem:[%s8 + $0x38] sm:$0xf]
    %v499 = vld [vmem:[%s8 + $0x3c] sm:$0xf]
    %v516 = vunpack.c.l.b16 %v484
    %v517 = vunpack.c.l.b16 %v485
    %v518 = vunpack.c.l.b16 %v486
    %v519 = vunpack.c.l.b16 %v487
    %v520 = vunpack.c.l.b16 %v488
    %v521 = vunpack.c.l.b16 %v489
    %v522 = vunpack.c.l.b16 %v490
    %v523 = vunpack.c.l.b16 %v491
    %v524 = vunpack.c.l.b16 %v492
    %v525 = vunpack.c.l.b16 %v493
    %v526 = vunpack.c.l.b16 %v494
    %v527 = vunpack.c.l.b16 %v495
    %v528 = vunpack.c.l.b16 %v496
    %v529 = vunpack.c.l.b16 %v497
    %v530 = vunpack.c.l.b16 %v498
    %v531 = vunpack.c.l.b16 %v499
    %v532 = vpack.c.b16 %v517, %v516
    %v533 = vpack.c.b16 %v519, %v518
    %v534 = vpack.c.b16 %v521, %v520
    %v535 = vpack.c.b16 %v523, %v522
    %v536 = vpack.c.b16 %v525, %v524
    %v537 = vpack.c.b16 %v527, %v526
    %v538 = vpack.c.b16 %v529, %v528
    %v539 = vpack.c.b16 %v531, %v530
    %548 = vmatprep.subr.bf16.mxu0 0
    %549 = vmatpush1.bf16.msra.mxu0 %v539
    %550 = vmatprep.subr.bf16.mxu0 0
    %551 = vmatpush1.bf16.msra.mxu0 %v538
    %552 = vmatprep.subr.bf16.mxu0 0
    %553 = vmatpush1.bf16.msra.mxu0 %v537
    %554 = vmatprep.subr.bf16.mxu0 0
    %555 = vmatpush1.bf16.msra.mxu0 %v536
    %556 = vmatprep.subr.bf16.mxu0 0
    %557 = vmatpush1.bf16.msra.mxu0 %v535
    %558 = vmatprep.subr.bf16.mxu0 0
    %559 = vmatpush1.bf16.msra.mxu0 %v534
    %560 = vmatprep.subr.bf16.mxu0 0
    %561 = vmatpush1.bf16.msra.mxu0 %v533
    %562 = vmatprep.subr.bf16.mxu0 0
    %563 = vmatpush1.bf16.msra.mxu0 %v532
    %564 = vmatprep.subr.bf16.mxu0 0
    %565 = vmatpush2.bf16.msra.mxu0 0
    %566 = vmatprep.subr.bf16.mxu0 0
    %567 = vmatpush2.bf16.msra.mxu0 0
    %568 = vmatprep.subr.bf16.mxu0 0
    %569 = vmatpush2.bf16.msra.mxu0 0
    %570 = vmatprep.subr.bf16.mxu0 0
    %571 = vmatpush2.bf16.msra.mxu0 0
    %572 = vmatprep.subr.bf16.mxu0 0
    %573 = vmatpush2.bf16.msra.mxu0 0
    %574 = vmatprep.subr.bf16.mxu0 0
    %575 = vmatpush2.bf16.msra.mxu0 0
    %576 = vmatprep.subr.bf16.mxu0 0
    %577 = vmatpush2.bf16.msra.mxu0 0
    %578 = vmatprep.subr.bf16.mxu0 0
    %579 = vmatpush2.bf16.msra.mxu0 0
    %580 = vmatprep.mubr.bf16.mxu0 0
    %581 = vmatmul.mubr.bf16.gmra.mxu0 %v483
    %v582 = vpop.f32.mrf.mxu0
    %v583 = vadd.f32 0.0, %v582
    %v584 = vpop.f32.mrf.mxu0
    %v585 = vpop.f32.mrf.mxu0
    %v586 = vpop.f32.mrf.mxu0
    %587 = vdwg.mxu0
    %v604 = vunpack.c.l.b16 %v467
    %v605 = vunpack.c.l.b16 %v468
    %v606 = vunpack.c.l.b16 %v469
    %v607 = vunpack.c.l.b16 %v470
    %v608 = vunpack.c.l.b16 %v471
    %v609 = vunpack.c.l.b16 %v472
    %v610 = vunpack.c.l.b16 %v473
    %v611 = vunpack.c.l.b16 %v474
    %v612 = vunpack.c.l.b16 %v475
    %v613 = vunpack.c.l.b16 %v476
    %v614 = vunpack.c.l.b16 %v477
    %v615 = vunpack.c.l.b16 %v478
    %v616 = vunpack.c.l.b16 %v479
    %v617 = vunpack.c.l.b16 %v480
    %v618 = vunpack.c.l.b16 %v481
    %v619 = vunpack.c.l.b16 %v482
    %v620 = vpack.c.b16 %v605, %v604
    %v621 = vpack.c.b16 %v607, %v606
    %v622 = vpack.c.b16 %v609, %v608
    %v623 = vpack.c.b16 %v611, %v610
    %v624 = vpack.c.b16 %v613, %v612
    %v625 = vpack.c.b16 %v615, %v614
    %v626 = vpack.c.b16 %v617, %v616
    %v627 = vpack.c.b16 %v619, %v618
    %636 = vmatprep.subr.bf16.mxu0 0
    %637 = vmatpush1.bf16.msra.mxu0 %v627
    %638 = vmatprep.subr.bf16.mxu0 0
    %639 = vmatpush1.bf16.msra.mxu0 %v626
    %640 = vmatprep.subr.bf16.mxu0 0
    %641 = vmatpush1.bf16.msra.mxu0 %v625
    %642 = vmatprep.subr.bf16.mxu0 0
    %643 = vmatpush1.bf16.msra.mxu0 %v624
    %644 = vmatprep.subr.bf16.mxu0 0
    %645 = vmatpush1.bf16.msra.mxu0 %v623
    %646 = vmatprep.subr.bf16.mxu0 0
    %647 = vmatpush1.bf16.msra.mxu0 %v622
    %648 = vmatprep.subr.bf16.mxu0 0
    %649 = vmatpush1.bf16.msra.mxu0 %v621
    %650 = vmatprep.subr.bf16.mxu0 0
    %651 = vmatpush1.bf16.msra.mxu0 %v620
    %652 = vmatprep.subr.bf16.mxu0 0
    %653 = vmatpush2.bf16.msra.mxu0 0
    %654 = vmatprep.subr.bf16.mxu0 0
    %655 = vmatpush2.bf16.msra.mxu0 0
    %656 = vmatprep.subr.bf16.mxu0 0
    %657 = vmatpush2.bf16.msra.mxu0 0
    %658 = vmatprep.subr.bf16.mxu0 0
    %659 = vmatpush2.bf16.msra.mxu0 0
    %660 = vmatprep.subr.bf16.mxu0 0
    %661 = vmatpush2.bf16.msra.mxu0 0
    %662 = vmatprep.subr.bf16.mxu0 0
    %663 = vmatpush2.bf16.msra.mxu0 0
    %664 = vmatprep.subr.bf16.mxu0 0
    %665 = vmatpush2.bf16.msra.mxu0 0
    %666 = vmatprep.subr.bf16.mxu0 0
    %667 = vmatpush2.bf16.msra.mxu0 0
    %668 = vmatprep.mubr.bf16.mxu0 0
    %669 = vmatmul.mubr.bf16.gmra.mxu0 %v42
    %v670 = vpop.f32.mrf.mxu0
    %v671 = vadd.f32 %v583, %v670
    %v672 = vpop.f32.mrf.mxu0
    %v673 = vpop.f32.mrf.mxu0
    %v674 = vpop.f32.mrf.mxu0
    %675 = vdwg.mxu0
    %v676 = vld [vmem:[%s9] sm:$0x1]
    %v678 = vlaneseq
    %v679 = vshrl.u32 %v678, 7
    %v680 = vsub.s32 0, %v679
    %v681 = vrot.slane %v676, %v680
    %v683 = vadd.f32 %v671, %v681
    %684 = vst [vmem:[%s11] sm:$0xff] %v683
    %685 = vst [vmem:[#allocation2] sm:$0xff] %v41
    %686 = vst [vmem:[#allocation2 + $0x8] sm:$0xff] %v466
    %vm687 = vcmp.gt.s32.totalorder %v128, %v126
    %vm688 = vmand %vm134, %vm687
    %v689 = vsel %vm688, 1, 0
    %v690 = vcvt.s32.f32 %v689
    %691 = vst.msk [vmem:[#allocation4] sm:$0xff] %vm96, %v690
    // Predicated region
    $region42: #{clip_gcn_forward.3} parent=1 // pred_check
      _
    $region43: #{clip_gcn_forward.3} parent=1 // pred_check_branch
      %693 = sbr.rel (0) target = $region45
    $region44: #{clip_gcn_forward.3} parent=1 // pred_region
      %s695 = ssub.s32 256, 256
      %696 = vsyncadd [#allocation3], %s695
      %s698 = sshll.u32 [#allocation2], 4
      %s699 = int_to_ptr.vmem [resolvable:$true] %s698
      %701 = dma.vmem_to_hbm [thread:$0]  %s699, 256, %s10, [#allocation3]
    $region45: #{clip_gcn_forward.3} parent=1 // pred_fallthru
      _
    // Predicated region
    $region46: #{clip_gcn_forward.3} parent=1 // pred_check
      _
    $region47: #{clip_gcn_forward.3} parent=1 // pred_check_branch
      %703 = sbr.rel (0) target = $region49
    $region48: #{clip_gcn_forward.3} parent=1 // pred_region
      _
    $region49: #{clip_gcn_forward.3} parent=1 // pred_fallthru
      _
    // Predicated region
    $region50: #{clip_gcn_forward.3} parent=1 // pred_check
      _
    $region51: #{clip_gcn_forward.3} parent=1 // pred_check_branch
      %705 = sbr.rel (0) target = $region53
    $region52: #{clip_gcn_forward.3} parent=1 // pred_region
      %s707 = ssub.s32 128, 128
      %708 = vsyncadd [#allocation5], %s707
      %s710 = sshll.u32 [#allocation4], 4
      %s711 = int_to_ptr.vmem [resolvable:$true] %s710
      %713 = dma.vmem_to_hbm [thread:$0]  %s711, 128, %s12, [#allocation5]
    $region53: #{clip_gcn_forward.3} parent=1 // pred_fallthru
      _
    // Predicated region
    $region54: #{clip_gcn_forward.3} parent=1 // pred_check
      _
    $region55: #{clip_gcn_forward.3} parent=1 // pred_check_branch
      %715 = sbr.rel (0) target = $region57
    $region56: #{clip_gcn_forward.3} parent=1 // pred_region
      %716 = dma.done [#allocation3], 256
    $region57: #{clip_gcn_forward.3} parent=1 // pred_fallthru
      _
    // Predicated region
    $region58: #{clip_gcn_forward.3} parent=1 // pred_check
      _
    $region59: #{clip_gcn_forward.3} parent=1 // pred_check_branch
      %718 = sbr.rel (0) target = $region61
    $region60: #{clip_gcn_forward.3} parent=1 // pred_region
      _
    $region61: #{clip_gcn_forward.3} parent=1 // pred_fallthru
      _
    // Predicated region
    $region62: #{clip_gcn_forward.3} parent=1 // pred_check
      _
    $region63: #{clip_gcn_forward.3} parent=1 // pred_check_branch
      %720 = sbr.rel (0) target = $region65
    $region64: #{clip_gcn_forward.3} parent=1 // pred_region
      %721 = dma.done [#allocation5], 128
    $region65: #{clip_gcn_forward.3} parent=1 // pred_fallthru
      _
    %722 = vsyncpa [#allocation3], 1
    %723 = vsyncpa [#allocation5], 1

</llo_original>
